<compile_context>
chip_gen: v5e
topology: v5e:2x2
jax: 0.10.0
libtpu: 0.0.40
codegen_flags: <defaults>
</compile_context>

<pallas_src>
import functools

import jax
import jax.numpy as jnp
from jax import lax
from jax.experimental import pallas as pl
from jax.experimental.pallas import tpu as pltpu

EPS = 1e-5


# ------------------------------ Pallas kernel ------------------------------ #

def _bottleneck_kernel(x_ref, w1_ref, b1_ref, w2_ref, b2_ref, w3_ref, b3_ref,
                       o_ref, h1p_ref, acc_ref, *, H, W):
    """Fused conv1+bn1+relu -> conv2(3x3)+bn2+relu -> conv3+bn3+residual+relu.

    Shapes (per grid step = one image):
      x_ref   : (H*W, Cin)            flattened NHWC image (also the residual)
      w1_ref  : (Cin, planes)         BN1 scale pre-folded into columns
      w2_ref  : (9, planes, planes)   tap-major [dy*3+dx, in, out], BN2 folded
      w3_ref  : (planes, Cout)        BN3 folded
      b*_ref  : (1, C)                folded BN biases
      o_ref   : (H*W, Cout)
      h1p_ref : (H*W + 2*W + 2, planes)  zero-padded flat h1 scratch (VMEM)
      acc_ref : (H*W, planes)            f32 conv2 accumulator (VMEM)
    """
    HW = H * W
    planes = w1_ref.shape[1]

    # ---- conv1 (1x1) + bn1 + relu -> h1, written into the padded scratch ----
    x = x_ref[...]                                            # (HW, Cin) f32
    h1 = jnp.dot(x, w1_ref[...], preferred_element_type=jnp.float32)
    h1 = jnp.maximum(h1 + b1_ref[...], 0.0)

    h1p_ref[...] = jnp.zeros_like(h1p_ref)                    # zero padding rows
    h1p_ref[pl.ds(W + 1, HW), :] = h1                         # valid rows

    # ---- conv2 (3x3, pad=1, stride=1): 9 shifted matmuls, f32 accumulation ---
    # Output pixel o = y*W + x of tap (dy, dx) reads scratch row o + dy*W + dx.
    # Taps with dx==0 / dx==2 wrap across image rows -> zero-mask those pixels.
    col = jax.lax.broadcasted_iota(jnp.int32, (HW, 1), 0) % W
    mask_l = (col != 0).astype(jnp.float32)                   # kills x == 0
    mask_r = (col != (W - 1)).astype(jnp.float32)             # kills x == W-1

    acc_ref[...] = jnp.zeros_like(acc_ref)
    for dy in range(3):
        for dx in range(3):
            tap = h1p_ref[pl.ds(dy * W + dx, HW), :]          # (HW, planes)
            if dx == 0:
                tap = tap * mask_l
            elif dx == 2:
                tap = tap * mask_r
            acc_ref[...] += jnp.dot(tap, w2_ref[dy * 3 + dx],
                                    preferred_element_type=jnp.float32)

    h2 = jnp.maximum(acc_ref[...] + b2_ref[...], 0.0)         # bn2 + relu (f32)

    # ---- conv3 (1x1) + bn3 + residual + relu (f32 epilogue, lane-dense store) -
    y = jnp.dot(h2, w3_ref[...], preferred_element_type=jnp.float32)
    y = y + b3_ref[...] + x_ref[...]
    o_ref[...] = jnp.maximum(y, 0.0).astype(o_ref.dtype)


# --------------------------------- Wrapper ---------------------------------- #

def bottleneck_forward(x_nchw, params):
    """Pallas implementation of Bottleneck.forward (stride=1, downsample=None)."""
    N, Cin, H, W = x_nchw.shape
    planes = params["w1"].shape[1]
    Cout = params["w3"].shape[1]
    assert Cin == Cout, "stride=1 / downsample=None requires inplanes == 4*planes"
    HW = H * W

    # NCHW -> NHWC -> (N, H*W, C). Single XLA transpose at entry / exit only.
    x = jnp.transpose(x_nchw, (0, 2, 3, 1)).reshape(N, HW, Cin)

    kernel = functools.partial(_bottleneck_kernel, H=H, W=W)

    out = pl.pallas_call(
        kernel,
        out_shape=jax.ShapeDtypeStruct((N, HW, Cout), x.dtype),
        grid=(N,),
        in_specs=[
            pl.BlockSpec((None, HW, Cin), lambda n: (n, 0, 0)),     # image tile
            pl.BlockSpec((Cin, planes), lambda n: (0, 0)),          # w1 (resident)
            pl.BlockSpec((1, planes), lambda n: (0, 0)),            # b1
            pl.BlockSpec((9, planes, planes), lambda n: (0, 0, 0)), # w2 taps
            pl.BlockSpec((1, planes), lambda n: (0, 0)),            # b2
            pl.BlockSpec((planes, Cout), lambda n: (0, 0)),         # w3
            pl.BlockSpec((1, Cout), lambda n: (0, 0)),              # b3
        ],
        out_specs=pl.BlockSpec((None, HW, Cout), lambda n: (n, 0, 0)),
        scratch_shapes=[
            pltpu.VMEM((HW + 2 * W + 2, planes), jnp.float32),      # padded h1
            pltpu.VMEM((HW, planes), jnp.float32),                  # conv2 acc
        ],
        compiler_params=pltpu.CompilerParams(
            dimension_semantics=("parallel",)),
    )(x, params["w1"], params["b1"], params["w2"], params["b2"],
      params["w3"], params["b3"])

    out = out.reshape(N, H, W, Cout)
    return jnp.transpose(out, (0, 3, 1, 2))                   # NHWC -> NCHW


# --------------------------- Parameter generation --------------------------- #

def init_params(key, inplanes, planes):
    """Synthetic parameters: PyTorch layouts plus folded kernel-side forms."""
    ks = jax.random.split(key, 15)

    def nrm(k, shape, scale=0.1):
        return scale * jax.random.normal(k, shape, dtype=jnp.float32)

    # PyTorch-layout conv weights (OIHW), bias=False.
    w1_oihw = nrm(ks[0], (planes, inplanes, 1, 1))
    w2_oihw = nrm(ks[1], (planes, planes, 3, 3))
    w3_oihw = nrm(ks[2], (planes * 4, planes, 1, 1))

    def make_bn(kg, kb, km, kv, c):
        gamma = 0.5 + jax.random.uniform(kg, (c,), dtype=jnp.float32)
        beta = nrm(kb, (c,))
        mean = nrm(km, (c,))
        var = 0.5 + jax.random.uniform(kv, (c,), dtype=jnp.float32)
        return gamma, beta, mean, var

    bn1 = make_bn(ks[3], ks[4], ks[5], ks[6], planes)
    bn2 = make_bn(ks[7], ks[8], ks[9], ks[10], planes)
    bn3 = make_bn(ks[11], ks[12], ks[13], ks[14], planes * 4)

    def fold(gamma, beta, mean, var):
        scale = gamma / jnp.sqrt(var + EPS)
        bias = beta - mean * scale
        return scale, bias

    s1, b1 = fold(*bn1)
    s2, b2 = fold(*bn2)
    s3, b3 = fold(*bn3)

    # Kernel-side GEMM layouts with the BN scale folded into the weights.
    w1 = jnp.transpose(w1_oihw[:, :, 0, 0], (1, 0)) * s1[None, :]     # (Cin, planes)
    w2 = (jnp.transpose(w2_oihw, (2, 3, 1, 0)).reshape(9, planes, planes)
          * s2[None, None, :])                                        # (9, in, out)
    w3 = jnp.transpose(w3_oihw[:, :, 0, 0], (1, 0)) * s3[None, :]     # (planes, 4*planes)

    kernel_params = dict(w1=w1, w2=w2, w3=w3,
                         b1=b1.reshape(1, -1), b2=b2.reshape(1, -1),
                         b3=b3.reshape(1, -1))
    torch_like = dict(w1=w1_oihw, w2=w2_oihw, w3=w3_oihw,
                      bn1=bn1, bn2=bn2, bn3=bn3)
    return kernel_params, torch_like


# ------------------------------ Pure-JAX reference -------------------------- #

def reference_forward(x_nchw, tp):
    dn = ("NCHW", "OIHW", "NCHW")

    def conv(x, w, pad):
        return lax.conv_general_dilated(x, w, (1, 1), pad, dimension_numbers=dn)

    def bn(x, p):
        gamma, beta, mean, var = p
        inv = gamma / jnp.sqrt(var + EPS)
        return x * inv[None, :, None, None] + (beta - mean * inv)[None, :, None, None]

    out = jax.nn.relu(bn(conv(x_nchw, tp["w1"], "VALID"), tp["bn1"]))
    out = jax.nn.relu(bn(conv(out, tp["w2"], ((1, 1), (1, 1))), tp["bn2"]))
    out = bn(conv(out, tp["w3"], "VALID"), tp["bn3"])
    return jax.nn.relu(out + x_nchw)


# ----------------------------------- Main ----------------------------------- #

if __name__ == "__main__":
    planes = 32
    inplanes = planes * 4          # 128 -> lane-dense 128-wide output channels
    N, H, W = 2, 8, 8              # grid extent 2 (even) -> both v7x TCs busy

    key = jax.random.PRNGKey(0)
    kx, kp = jax.random.split(key)
    x = jax.random.normal(kx, (N, inplanes, H, W), dtype=jnp.float32)

    kernel_params, torch_params = init_params(kp, inplanes, planes)

    out = jax.block_until_ready(bottleneck_forward(x, kernel_params))
    ref = jax.block_until_ready(reference_forward(x, torch_params))

    assert out.shape == (N, inplanes, H, W)
    max_err = jnp.max(jnp.abs(out - ref))
    assert jnp.allclose(out, ref, atol=2e-4, rtol=2e-4), f"max abs err = {max_err}"

    print("KERNEL_OK")
</pallas_src>

<mosaic_0001>
module attributes {stable_mosaic.version = 11 : i64} {
  func.func @_bottleneck_kernel(%arg0: i32, %arg1: memref<1x64x128xf32, #tpu.memory_space<vmem>>, %arg2: memref<128x32xf32, #tpu.memory_space<vmem>>, %arg3: memref<1x32xf32, #tpu.memory_space<vmem>>, %arg4: memref<9x32x32xf32, #tpu.memory_space<vmem>>, %arg5: memref<1x32xf32, #tpu.memory_space<vmem>>, %arg6: memref<32x128xf32, #tpu.memory_space<vmem>>, %arg7: memref<1x128xf32, #tpu.memory_space<vmem>>, %arg8: memref<1x64x128xf32, #tpu.memory_space<vmem>>, %arg9: memref<82x32xf32, #tpu.memory_space<vmem>>, %arg10: memref<64x32xf32, #tpu.memory_space<vmem>>) attributes {dimension_semantics = [#tpu.dimension_semantics<parallel>], iteration_bounds = array<i64: 2>, scalar_prefetch = 0 : i64, scratch_operands = 2 : i64, tpu.core_type = #tpu.core_type<tc>, window_params = [{transform_indices = @transform_0, window_bounds = array<i64: 1, 64, 128>}, {pipeline_mode = #tpu.pipeline_mode<synchronous>, transform_indices = @transform_1, window_bounds = array<i64: 128, 32>}, {pipeline_mode = #tpu.pipeline_mode<synchronous>, transform_indices = @transform_2, window_bounds = array<i64: 1, 32>}, {pipeline_mode = #tpu.pipeline_mode<synchronous>, transform_indices = @transform_3, window_bounds = array<i64: 9, 32, 32>}, {pipeline_mode = #tpu.pipeline_mode<synchronous>, transform_indices = @transform_4, window_bounds = array<i64: 1, 32>}, {pipeline_mode = #tpu.pipeline_mode<synchronous>, transform_indices = @transform_5, window_bounds = array<i64: 32, 128>}, {pipeline_mode = #tpu.pipeline_mode<synchronous>, transform_indices = @transform_6, window_bounds = array<i64: 1, 128>}, {transform_indices = @transform_7, window_bounds = array<i64: 1, 64, 128>}]} {
    %c0 = arith.constant 0 : index
    %c0_0 = arith.constant 0 : index
    %c0_1 = arith.constant 0 : index
    %0 = vector.load %arg1[%c0, %c0_0, %c0_1] : memref<1x64x128xf32, #tpu.memory_space<vmem>>, vector<1x64x128xf32>
    %1 = vector.shape_cast %0 : vector<1x64x128xf32> to vector<64x128xf32>
    %c0_2 = arith.constant 0 : index
    %c0_3 = arith.constant 0 : index
    %2 = vector.load %arg2[%c0_2, %c0_3] : memref<128x32xf32, #tpu.memory_space<vmem>>, vector<128x32xf32>
    %cst = arith.constant dense<0.000000e+00> : vector<64x32xf32>
    %3 = tpu.matmul %1, %2, %cst {dimension_numbers = #tpu.dot_dimension_numbers<[1], [0], [0], [1], [0, 0, 1, 1], [], []>} : vector<64x128xf32>, vector<128x32xf32>, vector<64x32xf32> -> vector<64x32xf32>
    %c0_4 = arith.constant 0 : index
    %c0_5 = arith.constant 0 : index
    %4 = vector.load %arg3[%c0_4, %c0_5] : memref<1x32xf32, #tpu.memory_space<vmem>>, vector<1x32xf32>
    %5 = vector.broadcast %4 : vector<1x32xf32> to vector<64x32xf32>
    %6 = arith.addf %3, %5 : vector<64x32xf32>
    %cst_6 = arith.constant 0.000000e+00 : f32
    %7 = vector.broadcast %cst_6 : f32 to vector<64x32xf32>
    %8 = arith.maximumf %6, %7 : vector<64x32xf32>
    %cst_7 = arith.constant 0.000000e+00 : f32
    %9 = vector.broadcast %cst_7 : f32 to vector<82x32xf32>
    %c0_8 = arith.constant 0 : index
    %c0_9 = arith.constant 0 : index
    %10 = vector.load %arg9[%c0_8, %c0_9] : memref<82x32xf32, #tpu.memory_space<vmem>>, vector<82x32xf32>
    tpu.vector_store %arg9[%c0_8, %c0_9], %9 {strides = array<i32>} : memref<82x32xf32, #tpu.memory_space<vmem>>, vector<82x32xf32>,
    %c9 = arith.constant 9 : index
    %c0_10 = arith.constant 0 : index
    %11 = vector.load %arg9[%c9, %c0_10] : memref<82x32xf32, #tpu.memory_space<vmem>>, vector<64x32xf32>
    tpu.vector_store %arg9[%c9, %c0_10], %8 {strides = array<i32>} : memref<82x32xf32, #tpu.memory_space<vmem>>, vector<64x32xf32>,
    %12 = tpu.iota {dimensions = array<i32: 0>} : vector<64x1xi32>
    %c8_i32 = arith.constant 8 : i32
    %c0_i32 = arith.constant 0 : i32
    %13 = arith.cmpi eq, %c8_i32, %c0_i32 : i32
    %c1_i32 = arith.constant 1 : i32
    %14 = arith.select %13, %c1_i32, %c8_i32 : i32
    %15 = vector.broadcast %14 : i32 to vector<64x1xi32>
    %16 = arith.remsi %12, %15 : vector<64x1xi32>
    %c0_i32_11 = arith.constant 0 : i32
    %17 = vector.broadcast %c0_i32_11 : i32 to vector<64x1xi32>
    %18 = arith.cmpi ne, %16, %17 : vector<64x1xi32>
    %c0_i32_12 = arith.constant 0 : i32
    %19 = vector.broadcast %c0_i32_12 : i32 to vector<64x1xi32>
    %20 = arith.cmpi slt, %16, %19 : vector<64x1xi32>
    %c0_i32_13 = arith.constant 0 : i32
    %21 = arith.cmpi slt, %14, %c0_i32_13 : i32
    %22 = vector.broadcast %21 : i1 to vector<64x1xi1>
    %23 = vector.broadcast %22 : vector<64x1xi1> to vector<64x1xi1>
    %24 = arith.xori %20, %23 : vector<64x1xi1>
    %25 = arith.andi %24, %18 : vector<64x1xi1>
    %26 = vector.broadcast %14 : i32 to vector<64x1xi32>
    %27 = arith.addi %16, %26 : vector<64x1xi32>
    %28 = arith.select %25, %27, %16 : vector<64x1xi1>, vector<64x1xi32>
    %c0_i32_14 = arith.constant 0 : i32
    %29 = vector.broadcast %c0_i32_14 : i32 to vector<64x1xi32>
    %30 = arith.cmpi ne, %28, %29 : vector<64x1xi32>
    %31 = arith.extui %30 : vector<64x1xi1> to vector<64x1xi32>
    %32 = arith.sitofp %31 : vector<64x1xi32> to vector<64x1xf32>
    %c7_i32 = arith.constant 7 : i32
    %33 = vector.broadcast %c7_i32 : i32 to vector<64x1xi32>
    %34 = arith.cmpi ne, %28, %33 : vector<64x1xi32>
    %35 = arith.extui %34 : vector<64x1xi1> to vector<64x1xi32>
    %36 = arith.sitofp %35 : vector<64x1xi32> to vector<64x1xf32>
    %cst_15 = arith.constant 0.000000e+00 : f32
    %37 = vector.broadcast %cst_15 : f32 to vector<64x32xf32>
    %c0_16 = arith.constant 0 : index
    %c0_17 = arith.constant 0 : index
    %38 = vector.load %arg10[%c0_16, %c0_17] : memref<64x32xf32, #tpu.memory_space<vmem>>, vector<64x32xf32>
    tpu.vector_store %arg10[%c0_16, %c0_17], %37 {strides = array<i32>} : memref<64x32xf32, #tpu.memory_space<vmem>>, vector<64x32xf32>,
    %c0_18 = arith.constant 0 : index
    %c0_19 = arith.constant 0 : index
    %39 = vector.load %arg9[%c0_18, %c0_19] : memref<82x32xf32, #tpu.memory_space<vmem>>, vector<64x32xf32>
    %40 = vector.broadcast %32 : vector<64x1xf32> to vector<64x32xf32>
    %41 = arith.mulf %39, %40 : vector<64x32xf32>
    %c0_20 = arith.constant 0 : index
    %c0_21 = arith.constant 0 : index
    %42 = vector.load %arg10[%c0_20, %c0_21] : memref<64x32xf32, #tpu.memory_space<vmem>>, vector<64x32xf32>
    %c0_22 = arith.constant 0 : index
    %c0_23 = arith.constant 0 : index
    %c0_24 = arith.constant 0 : index
    %43 = vector.load %arg4[%c0_22, %c0_23, %c0_24] : memref<9x32x32xf32, #tpu.memory_space<vmem>>, vector<1x32x32xf32>
    %44 = vector.shape_cast %43 : vector<1x32x32xf32> to vector<32x32xf32>
    %cst_25 = arith.constant dense<0.000000e+00> : vector<64x32xf32>
    %45 = tpu.matmul %41, %44, %cst_25 {dimension_numbers = #tpu.dot_dimension_numbers<[1], [0], [0], [1], [0, 0, 1, 1], [], []>} : vector<64x32xf32>, vector<32x32xf32>, vector<64x32xf32> -> vector<64x32xf32>
    %46 = arith.addf %42, %45 : vector<64x32xf32>
    %c0_26 = arith.constant 0 : index
    %c0_27 = arith.constant 0 : index
    %47 = vector.load %arg10[%c0_26, %c0_27] : memref<64x32xf32, #tpu.memory_space<vmem>>, vector<64x32xf32>
    tpu.vector_store %arg10[%c0_26, %c0_27], %46 {strides = array<i32>} : memref<64x32xf32, #tpu.memory_space<vmem>>, vector<64x32xf32>,
    %c1 = arith.constant 1 : index
    %c0_28 = arith.constant 0 : index
    %48 = vector.load %arg9[%c1, %c0_28] : memref<82x32xf32, #tpu.memory_space<vmem>>, vector<64x32xf32>
    %c0_29 = arith.constant 0 : index
    %c0_30 = arith.constant 0 : index
    %49 = vector.load %arg10[%c0_29, %c0_30] : memref<64x32xf32, #tpu.memory_space<vmem>>, vector<64x32xf32>
    %c1_31 = arith.constant 1 : index
    %c0_32 = arith.constant 0 : index
    %c0_33 = arith.constant 0 : index
    %50 = vector.load %arg4[%c1_31, %c0_32, %c0_33] : memref<9x32x32xf32, #tpu.memory_space<vmem>>, vector<1x32x32xf32>
    %51 = vector.shape_cast %50 : vector<1x32x32xf32> to vector<32x32xf32>
    %cst_34 = arith.constant dense<0.000000e+00> : vector<64x32xf32>
    %52 = tpu.matmul %48, %51, %cst_34 {dimension_numbers = #tpu.dot_dimension_numbers<[1], [0], [0], [1], [0, 0, 1, 1], [], []>} : vector<64x32xf32>, vector<32x32xf32>, vector<64x32xf32> -> vector<64x32xf32>
    %53 = arith.addf %49, %52 : vector<64x32xf32>
    %c0_35 = arith.constant 0 : index
    %c0_36 = arith.constant 0 : index
    %54 = vector.load %arg10[%c0_35, %c0_36] : memref<64x32xf32, #tpu.memory_space<vmem>>, vector<64x32xf32>
    tpu.vector_store %arg10[%c0_35, %c0_36], %53 {strides = array<i32>} : memref<64x32xf32, #tpu.memory_space<vmem>>, vector<64x32xf32>,
    %c2 = arith.constant 2 : index
    %c0_37 = arith.constant 0 : index
    %55 = vector.load %arg9[%c2, %c0_37] : memref<82x32xf32, #tpu.memory_space<vmem>>, vector<64x32xf32>
    %56 = vector.broadcast %36 : vector<64x1xf32> to vector<64x32xf32>
    %57 = arith.mulf %55, %56 : vector<64x32xf32>
    %c0_38 = arith.constant 0 : index
    %c0_39 = arith.constant 0 : index
    %58 = vector.load %arg10[%c0_38, %c0_39] : memref<64x32xf32, #tpu.memory_space<vmem>>, vector<64x32xf32>
    %c2_40 = arith.constant 2 : index
    %c0_41 = arith.constant 0 : index
    %c0_42 = arith.constant 0 : index
    %59 = vector.load %arg4[%c2_40, %c0_41, %c0_42] : memref<9x32x32xf32, #tpu.memory_space<vmem>>, vector<1x32x32xf32>
    %60 = vector.shape_cast %59 : vector<1x32x32xf32> to vector<32x32xf32>
    %cst_43 = arith.constant dense<0.000000e+00> : vector<64x32xf32>
    %61 = tpu.matmul %57, %60, %cst_43 {dimension_numbers = #tpu.dot_dimension_numbers<[1], [0], [0], [1], [0, 0, 1, 1], [], []>} : vector<64x32xf32>, vector<32x32xf32>, vector<64x32xf32> -> vector<64x32xf32>
    %62 = arith.addf %58, %61 : vector<64x32xf32>
    %c0_44 = arith.constant 0 : index
    %c0_45 = arith.constant 0 : index
    %63 = vector.load %arg10[%c0_44, %c0_45] : memref<64x32xf32, #tpu.memory_space<vmem>>, vector<64x32xf32>
    tpu.vector_store %arg10[%c0_44, %c0_45], %62 {strides = array<i32>} : memref<64x32xf32, #tpu.memory_space<vmem>>, vector<64x32xf32>,
    %c8 = arith.constant 8 : index
    %c0_46 = arith.constant 0 : index
    %64 = vector.load %arg9[%c8, %c0_46] : memref<82x32xf32, #tpu.memory_space<vmem>>, vector<64x32xf32>
    %65 = vector.broadcast %32 : vector<64x1xf32> to vector<64x32xf32>
    %66 = arith.mulf %64, %65 : vector<64x32xf32>
    %c0_47 = arith.constant 0 : index
    %c0_48 = arith.constant 0 : index
    %67 = vector.load %arg10[%c0_47, %c0_48] : memref<64x32xf32, #tpu.memory_space<vmem>>, vector<64x32xf32>
    %c3 = arith.constant 3 : index
    %c0_49 = arith.constant 0 : index
    %c0_50 = arith.constant 0 : index
    %68 = vector.load %arg4[%c3, %c0_49, %c0_50] : memref<9x32x32xf32, #tpu.memory_space<vmem>>, vector<1x32x32xf32>
    %69 = vector.shape_cast %68 : vector<1x32x32xf32> to vector<32x32xf32>
    %cst_51 = arith.constant dense<0.000000e+00> : vector<64x32xf32>
    %70 = tpu.matmul %66, %69, %cst_51 {dimension_numbers = #tpu.dot_dimension_numbers<[1], [0], [0], [1], [0, 0, 1, 1], [], []>} : vector<64x32xf32>, vector<32x32xf32>, vector<64x32xf32> -> vector<64x32xf32>
    %71 = arith.addf %67, %70 : vector<64x32xf32>
    %c0_52 = arith.constant 0 : index
    %c0_53 = arith.constant 0 : index
    %72 = vector.load %arg10[%c0_52, %c0_53] : memref<64x32xf32, #tpu.memory_space<vmem>>, vector<64x32xf32>
    tpu.vector_store %arg10[%c0_52, %c0_53], %71 {strides = array<i32>} : memref<64x32xf32, #tpu.memory_space<vmem>>, vector<64x32xf32>,
    %c9_54 = arith.constant 9 : index
    %c0_55 = arith.constant 0 : index
    %73 = vector.load %arg9[%c9_54, %c0_55] : memref<82x32xf32, #tpu.memory_space<vmem>>, vector<64x32xf32>
    %c0_56 = arith.constant 0 : index
    %c0_57 = arith.constant 0 : index
    %74 = vector.load %arg10[%c0_56, %c0_57] : memref<64x32xf32, #tpu.memory_space<vmem>>, vector<64x32xf32>
    %c4 = arith.constant 4 : index
    %c0_58 = arith.constant 0 : index
    %c0_59 = arith.constant 0 : index
    %75 = vector.load %arg4[%c4, %c0_58, %c0_59] : memref<9x32x32xf32, #tpu.memory_space<vmem>>, vector<1x32x32xf32>
    %76 = vector.shape_cast %75 : vector<1x32x32xf32> to vector<32x32xf32>
    %cst_60 = arith.constant dense<0.000000e+00> : vector<64x32xf32>
    %77 = tpu.matmul %73, %76, %cst_60 {dimension_numbers = #tpu.dot_dimension_numbers<[1], [0], [0], [1], [0, 0, 1, 1], [], []>} : vector<64x32xf32>, vector<32x32xf32>, vector<64x32xf32> -> vector<64x32xf32>
    %78 = arith.addf %74, %77 : vector<64x32xf32>
    %c0_61 = arith.constant 0 : index
    %c0_62 = arith.constant 0 : index
    %79 = vector.load %arg10[%c0_61, %c0_62] : memref<64x32xf32, #tpu.memory_space<vmem>>, vector<64x32xf32>
    tpu.vector_store %arg10[%c0_61, %c0_62], %78 {strides = array<i32>} : memref<64x32xf32, #tpu.memory_space<vmem>>, vector<64x32xf32>,
    %c10 = arith.constant 10 : index
    %c0_63 = arith.constant 0 : index
    %80 = vector.load %arg9[%c10, %c0_63] : memref<82x32xf32, #tpu.memory_space<vmem>>, vector<64x32xf32>
    %81 = vector.broadcast %36 : vector<64x1xf32> to vector<64x32xf32>
    %82 = arith.mulf %80, %81 : vector<64x32xf32>
    %c0_64 = arith.constant 0 : index
    %c0_65 = arith.constant 0 : index
    %83 = vector.load %arg10[%c0_64, %c0_65] : memref<64x32xf32, #tpu.memory_space<vmem>>, vector<64x32xf32>
    %c5 = arith.constant 5 : index
    %c0_66 = arith.constant 0 : index
    %c0_67 = arith.constant 0 : index
    %84 = vector.load %arg4[%c5, %c0_66, %c0_67] : memref<9x32x32xf32, #tpu.memory_space<vmem>>, vector<1x32x32xf32>
    %85 = vector.shape_cast %84 : vector<1x32x32xf32> to vector<32x32xf32>
    %cst_68 = arith.constant dense<0.000000e+00> : vector<64x32xf32>
    %86 = tpu.matmul %82, %85, %cst_68 {dimension_numbers = #tpu.dot_dimension_numbers<[1], [0], [0], [1], [0, 0, 1, 1], [], []>} : vector<64x32xf32>, vector<32x32xf32>, vector<64x32xf32> -> vector<64x32xf32>
    %87 = arith.addf %83, %86 : vector<64x32xf32>
    %c0_69 = arith.constant 0 : index
    %c0_70 = arith.constant 0 : index
    %88 = vector.load %arg10[%c0_69, %c0_70] : memref<64x32xf32, #tpu.memory_space<vmem>>, vector<64x32xf32>
    tpu.vector_store %arg10[%c0_69, %c0_70], %87 {strides = array<i32>} : memref<64x32xf32, #tpu.memory_space<vmem>>, vector<64x32xf32>,
    %c16 = arith.constant 16 : index
    %c0_71 = arith.constant 0 : index
    %89 = vector.load %arg9[%c16, %c0_71] : memref<82x32xf32, #tpu.memory_space<vmem>>, vector<64x32xf32>
    %90 = vector.broadcast %32 : vector<64x1xf32> to vector<64x32xf32>
    %91 = arith.mulf %89, %90 : vector<64x32xf32>
    %c0_72 = arith.constant 0 : index
    %c0_73 = arith.constant 0 : index
    %92 = vector.load %arg10[%c0_72, %c0_73] : memref<64x32xf32, #tpu.memory_space<vmem>>, vector<64x32xf32>
    %c6 = arith.constant 6 : index
    %c0_74 = arith.constant 0 : index
    %c0_75 = arith.constant 0 : index
    %93 = vector.load %arg4[%c6, %c0_74, %c0_75] : memref<9x32x32xf32, #tpu.memory_space<vmem>>, vector<1x32x32xf32>
    %94 = vector.shape_cast %93 : vector<1x32x32xf32> to vector<32x32xf32>
    %cst_76 = arith.constant dense<0.000000e+00> : vector<64x32xf32>
    %95 = tpu.matmul %91, %94, %cst_76 {dimension_numbers = #tpu.dot_dimension_numbers<[1], [0], [0], [1], [0, 0, 1, 1], [], []>} : vector<64x32xf32>, vector<32x32xf32>, vector<64x32xf32> -> vector<64x32xf32>
    %96 = arith.addf %92, %95 : vector<64x32xf32>
    %c0_77 = arith.constant 0 : index
    %c0_78 = arith.constant 0 : index
    %97 = vector.load %arg10[%c0_77, %c0_78] : memref<64x32xf32, #tpu.memory_space<vmem>>, vector<64x32xf32>
    tpu.vector_store %arg10[%c0_77, %c0_78], %96 {strides = array<i32>} : memref<64x32xf32, #tpu.memory_space<vmem>>, vector<64x32xf32>,
    %c17 = arith.constant 17 : index
    %c0_79 = arith.constant 0 : index
    %98 = vector.load %arg9[%c17, %c0_79] : memref<82x32xf32, #tpu.memory_space<vmem>>, vector<64x32xf32>
    %c0_80 = arith.constant 0 : index
    %c0_81 = arith.constant 0 : index
    %99 = vector.load %arg10[%c0_80, %c0_81] : memref<64x32xf32, #tpu.memory_space<vmem>>, vector<64x32xf32>
    %c7 = arith.constant 7 : index
    %c0_82 = arith.constant 0 : index
    %c0_83 = arith.constant 0 : index
    %100 = vector.load %arg4[%c7, %c0_82, %c0_83] : memref<9x32x32xf32, #tpu.memory_space<vmem>>, vector<1x32x32xf32>
    %101 = vector.shape_cast %100 : vector<1x32x32xf32> to vector<32x32xf32>
    %cst_84 = arith.constant dense<0.000000e+00> : vector<64x32xf32>
    %102 = tpu.matmul %98, %101, %cst_84 {dimension_numbers = #tpu.dot_dimension_numbers<[1], [0], [0], [1], [0, 0, 1, 1], [], []>} : vector<64x32xf32>, vector<32x32xf32>, vector<64x32xf32> -> vector<64x32xf32>
    %103 = arith.addf %99, %102 : vector<64x32xf32>
    %c0_85 = arith.constant 0 : index
    %c0_86 = arith.constant 0 : index
    %104 = vector.load %arg10[%c0_85, %c0_86] : memref<64x32xf32, #tpu.memory_space<vmem>>, vector<64x32xf32>
    tpu.vector_store %arg10[%c0_85, %c0_86], %103 {strides = array<i32>} : memref<64x32xf32, #tpu.memory_space<vmem>>, vector<64x32xf32>,
    %c18 = arith.constant 18 : index
    %c0_87 = arith.constant 0 : index
    %105 = vector.load %arg9[%c18, %c0_87] : memref<82x32xf32, #tpu.memory_space<vmem>>, vector<64x32xf32>
    %106 = vector.broadcast %36 : vector<64x1xf32> to vector<64x32xf32>
    %107 = arith.mulf %105, %106 : vector<64x32xf32>
    %c0_88 = arith.constant 0 : index
    %c0_89 = arith.constant 0 : index
    %108 = vector.load %arg10[%c0_88, %c0_89] : memref<64x32xf32, #tpu.memory_space<vmem>>, vector<64x32xf32>
    %c8_90 = arith.constant 8 : index
    %c0_91 = arith.constant 0 : index
    %c0_92 = arith.constant 0 : index
    %109 = vector.load %arg4[%c8_90, %c0_91, %c0_92] : memref<9x32x32xf32, #tpu.memory_space<vmem>>, vector<1x32x32xf32>
    %110 = vector.shape_cast %109 : vector<1x32x32xf32> to vector<32x32xf32>
    %cst_93 = arith.constant dense<0.000000e+00> : vector<64x32xf32>
    %111 = tpu.matmul %107, %110, %cst_93 {dimension_numbers = #tpu.dot_dimension_numbers<[1], [0], [0], [1], [0, 0, 1, 1], [], []>} : vector<64x32xf32>, vector<32x32xf32>, vector<64x32xf32> -> vector<64x32xf32>
    %112 = arith.addf %108, %111 : vector<64x32xf32>
    %c0_94 = arith.constant 0 : index
    %c0_95 = arith.constant 0 : index
    %113 = vector.load %arg10[%c0_94, %c0_95] : memref<64x32xf32, #tpu.memory_space<vmem>>, vector<64x32xf32>
    tpu.vector_store %arg10[%c0_94, %c0_95], %112 {strides = array<i32>} : memref<64x32xf32, #tpu.memory_space<vmem>>, vector<64x32xf32>,
    %c0_96 = arith.constant 0 : index
    %c0_97 = arith.constant 0 : index
    %114 = vector.load %arg10[%c0_96, %c0_97] : memref<64x32xf32, #tpu.memory_space<vmem>>, vector<64x32xf32>
    %c0_98 = arith.constant 0 : index
    %c0_99 = arith.constant 0 : index
    %115 = vector.load %arg5[%c0_98, %c0_99] : memref<1x32xf32, #tpu.memory_space<vmem>>, vector<1x32xf32>
    %116 = vector.broadcast %115 : vector<1x32xf32> to vector<64x32xf32>
    %117 = arith.addf %114, %116 : vector<64x32xf32>
    %cst_100 = arith.constant 0.000000e+00 : f32
    %118 = vector.broadcast %cst_100 : f32 to vector<64x32xf32>
    %119 = arith.maximumf %117, %118 : vector<64x32xf32>
    %c0_101 = arith.constant 0 : index
    %c0_102 = arith.constant 0 : index
    %120 = vector.load %arg6[%c0_101, %c0_102] : memref<32x128xf32, #tpu.memory_space<vmem>>, vector<32x128xf32>
    %cst_103 = arith.constant dense<0.000000e+00> : vector<64x128xf32>
    %121 = tpu.matmul %119, %120, %cst_103 {dimension_numbers = #tpu.dot_dimension_numbers<[1], [0], [0], [1], [0, 0, 1, 1], [], []>} : vector<64x32xf32>, vector<32x128xf32>, vector<64x128xf32> -> vector<64x128xf32>
    %c0_104 = arith.constant 0 : index
    %c0_105 = arith.constant 0 : index
    %122 = vector.load %arg7[%c0_104, %c0_105] : memref<1x128xf32, #tpu.memory_space<vmem>>, vector<1x128xf32>
    %123 = vector.broadcast %122 : vector<1x128xf32> to vector<64x128xf32>
    %124 = arith.addf %121, %123 : vector<64x128xf32>
    %c0_106 = arith.constant 0 : index
    %c0_107 = arith.constant 0 : index
    %c0_108 = arith.constant 0 : index
    %125 = vector.load %arg1[%c0_106, %c0_107, %c0_108] : memref<1x64x128xf32, #tpu.memory_space<vmem>>, vector<1x64x128xf32>
    %126 = vector.shape_cast %125 : vector<1x64x128xf32> to vector<64x128xf32>
    %127 = arith.addf %124, %126 : vector<64x128xf32>
    %cst_109 = arith.constant 0.000000e+00 : f32
    %128 = vector.broadcast %cst_109 : f32 to vector<64x128xf32>
    %129 = arith.maximumf %127, %128 : vector<64x128xf32>
    %c0_110 = arith.constant 0 : index
    %c0_111 = arith.constant 0 : index
    %c0_112 = arith.constant 0 : index
    %130 = vector.load %arg8[%c0_110, %c0_111, %c0_112] : memref<1x64x128xf32, #tpu.memory_space<vmem>>, vector<1x64x128xf32>
    %131 = vector.shape_cast %130 : vector<1x64x128xf32> to vector<64x128xf32>
    %132 = vector.shape_cast %129 : vector<64x128xf32> to vector<1x64x128xf32>
    tpu.vector_store %arg8[%c0_110, %c0_111, %c0_112], %132 {strides = array<i32>} : memref<1x64x128xf32, #tpu.memory_space<vmem>>, vector<1x64x128xf32>,
    return
  }
  func.func @transform_0(%arg0: i32) -> (i32, i32, i32) {
    %c0_i32 = arith.constant 0 : i32
    %c0_i32_0 = arith.constant 0 : i32
    %c0_i32_1 = arith.constant 0 : i32
    return %arg0, %c0_i32, %c0_i32_0 : i32, i32, i32
  }
  func.func @transform_1(%arg0: i32) -> (i32, i32) {
    %c0_i32 = arith.constant 0 : i32
    %c0_i32_0 = arith.constant 0 : i32
    %c0_i32_1 = arith.constant 0 : i32
    return %c0_i32, %c0_i32_0 : i32, i32
  }
  func.func @transform_2(%arg0: i32) -> (i32, i32) {
    %c0_i32 = arith.constant 0 : i32
    %c0_i32_0 = arith.constant 0 : i32
    %c0_i32_1 = arith.constant 0 : i32
    return %c0_i32, %c0_i32_0 : i32, i32
  }
  func.func @transform_3(%arg0: i32) -> (i32, i32, i32) {
    %c0_i32 = arith.constant 0 : i32
    %c0_i32_0 = arith.constant 0 : i32
    %c0_i32_1 = arith.constant 0 : i32
    %c0_i32_2 = arith.constant 0 : i32
    return %c0_i32, %c0_i32_0, %c0_i32_1 : i32, i32, i32
  }
  func.func @transform_4(%arg0: i32) -> (i32, i32) {
    %c0_i32 = arith.constant 0 : i32
    %c0_i32_0 = arith.constant 0 : i32
    %c0_i32_1 = arith.constant 0 : i32
    return %c0_i32, %c0_i32_0 : i32, i32
  }
  func.func @transform_5(%arg0: i32) -> (i32, i32) {
    %c0_i32 = arith.constant 0 : i32
    %c0_i32_0 = arith.constant 0 : i32
    %c0_i32_1 = arith.constant 0 : i32
    return %c0_i32, %c0_i32_0 : i32, i32
  }
  func.func @transform_6(%arg0: i32) -> (i32, i32) {
    %c0_i32 = arith.constant 0 : i32
    %c0_i32_0 = arith.constant 0 : i32
    %c0_i32_1 = arith.constant 0 : i32
    return %c0_i32, %c0_i32_0 : i32, i32
  }
  func.func @transform_7(%arg0: i32) -> (i32, i32, i32) {
    %c0_i32 = arith.constant 0 : i32
    %c0_i32_0 = arith.constant 0 : i32
    %c0_i32_1 = arith.constant 0 : i32
    return %arg0, %c0_i32, %c0_i32_0 : i32, i32, i32
  }
}

</mosaic_0001>

<llo_original>
// kernel: tpu_custom_call.1
$region0: #{tpu_custom_call.1}
  #allocation0 [shape = 'u32[]', space=smem, size = 0x4, offset = 0x4, fixed_abs, tag = 'smem constant byte address 0x4 - core index']
  #allocation1 [shape = 'u32[72,128]{1,0:T(1,128)}', space=vmem, size = 0x9000, scoped, tag = 'internal scratch']
  #allocation2 [shape = 'f32[82,32]{1,0:T(8,128)}', space=vmem, size = 0xb000, scoped, tag = 'scratch operand']
  #allocation3 [shape = 'f32[64,32]{1,0:T(8,128)}', space=vmem, size = 0x8000, scoped, tag = 'scratch operand']
  %s0 = inlined_call_operand.vmem [shape: f32[2,64,128], index: 0, kind: input, shape index: {}]
  %s1 = inlined_call_operand.vmem [shape: f32[128,32], index: 1, kind: input, shape index: {}]
  %s2 = inlined_call_operand.vmem [shape: f32[1,32], index: 2, kind: input, shape index: {}]
  %s3 = inlined_call_operand.hbm [shape: f32[9,32,32], index: 3, kind: input, shape index: {}]
  %s4 = inlined_call_operand.vmem [shape: f32[1,32], index: 4, kind: input, shape index: {}]
  %s5 = inlined_call_operand.vmem [shape: f32[32,128], index: 5, kind: input, shape index: {}]
  %s6 = inlined_call_operand.vmem [shape: f32[1,128], index: 6, kind: input, shape index: {}]
  %s7 = inlined_call_operand.hbm [shape: f32[2,64,128], index: 7, kind: output, shape index: {}]
  %s8 = sld [smem:[#allocation0]]
  $region65: #{tpu_custom_call.1} parent=0
    _
  %s10 = ssub.s32 1, %s8
  %s11 = scalar_select 0, %s10, %s8
  $region1: #{tpu_custom_call.1} parent=0
    #allocation4 [shape = 'u8[147456]{0}', space=vmem, size = 0x24000, scoped, tag = 'input window, operand 3, single buffered']
    #allocation5 [shape = 's32[2]{0}', space=sflag, size = 0x8, scoped, tag = 'scoped memory for tpu_custom_call.1']
    #allocation6 [shape = 's32[2]{0}', space=sflag, size = 0x8, scoped, tag = 'scoped memory for tpu_custom_call.1']
    #allocation7 [shape = 'u8[65536]{0}', space=vmem, size = 0x10000, scoped, tag = 'output window, operand 0']
    %12 = vsyncpa [#allocation5], 0
    %13 = vsyncpa [#allocation6], 0
    %s14 = scalar_lea.sflag [#allocation6], 1
    %15 = vsyncpa %s14, 0
    loop: start=0, step=1, limit=4
    $region2: #{tpu_custom_call.1} parent=1 // loop_pre_header
      _
    $region3: #{tpu_custom_call.1} parent=1 // loop_header
      %s17 = sphi 0, %s21
      %p18 = scmp.ge.s32.totalorder %s17, 4
      %s27 = sphi 0, %s29
      %s30 = sphi 0, %s27
      %s31 = sphi 0, %s30
      %s47 = sphi 0, %s31
      %s51 = sphi 0, %s51
      %s53 = sphi 0, %s51
      %s54 = sphi 0, %s53
      %s68 = sphi 0, %s54
      %s72 = sphi 0, %s72
      %s74 = sphi 0, %s72
      %s75 = sphi 0, %s74
      %s89 = sphi 0, %s75
      %s93 = sphi 0, %s93
      %s95 = sphi 0, %s93
      %s96 = sphi 0, %s95
      %s110 = sphi 0, %s96
      %s114 = sphi 0, %s114
      %s116 = sphi 0, %s114
      %s117 = sphi 0, %s116
      %s131 = sphi 0, %s117
      %s135 = sphi 0, %s135
      %s137 = sphi 0, %s135
      %s138 = sphi 0, %s137
      %s152 = sphi 0, %s138
      %s156 = sphi 0, %s156
      %s158 = sphi 0, %s156
      %s159 = sphi 0, %s158
      %s173 = sphi 0, %s159
      %s179 = sphi 0, %s181
      %s182 = sphi 0, %s179
      %s183 = sphi 0, %s182
      %s199 = sphi 0, %s183
    $region4: #{tpu_custom_call.1} parent=1 // loop_header_branch
      %20 = sbr.rel (%p18) target = $region8
    $region5: #{tpu_custom_call.1} parent=1 // loop_body
      %s22 = ssub.s32 %s17, 1
      %s23 = ssub.s32 %s17, 2
      %s24 = sadd.s32 %s17, 1
      %s25 = ssub.s32 %s17, %s24
      %p26 = scmp.eq.s32.totalorder %s25, 0
      %s28 = sadd.s32 %s27, 1
      %s29 = scalar_select %p26, %s27, %s28
      %p32 = pneg %p26
      %p33 = scmp.eq.s32.totalorder %s17, 1
      %p34 = por %p32, %p33
      %p35 = scmp.ne.s32.totalorder %s27, %s30
      %p36 = scmp.eq.s32.totalorder %s17, 0
      %p37 = por %p35, %p36
      %p38 = scmp.ne.s32.totalorder %s27, %s30
      %p39 = scmp.eq.s32.totalorder %s22, 1
      %p40 = por %p38, %p39
      %p41 = scmp.ne.s32.totalorder %s30, %s31
      %p42 = scmp.eq.s32.totalorder %s22, 0
      %p43 = por %p41, %p42
      %p44 = scmp.ne.s32.totalorder %s30, %s31
      %p45 = scmp.eq.s32.totalorder %s23, 1
      %p46 = por %p44, %p45
      %p48 = scmp.ne.s32.totalorder %s31, %s47
      %p49 = scmp.eq.s32.totalorder %s23, 0
      %p50 = por %p48, %p49
      %s52 = sadd.s32 %s51, 1
      %p55 = scmp.eq.s32.totalorder %s17, 1
      %p56 = scmp.ne.s32.totalorder %s51, %s53
      %p57 = scmp.eq.s32.totalorder %s17, 0
      %p58 = por %p56, %p57
      %p59 = scmp.ne.s32.totalorder %s51, %s53
      %p60 = scmp.eq.s32.totalorder %s22, 1
      %p61 = por %p59, %p60
      %p62 = scmp.ne.s32.totalorder %s53, %s54
      %p63 = scmp.eq.s32.totalorder %s22, 0
      %p64 = por %p62, %p63
      %p65 = scmp.ne.s32.totalorder %s53, %s54
      %p66 = scmp.eq.s32.totalorder %s23, 1
      %p67 = por %p65, %p66
      %p69 = scmp.ne.s32.totalorder %s54, %s68
      %p70 = scmp.eq.s32.totalorder %s23, 0
      %p71 = por %p69, %p70
      %s73 = sadd.s32 %s72, 1
      %p76 = scmp.eq.s32.totalorder %s17, 1
      %p77 = scmp.ne.s32.totalorder %s72, %s74
      %p78 = scmp.eq.s32.totalorder %s17, 0
      %p79 = por %p77, %p78
      %p80 = scmp.ne.s32.totalorder %s72, %s74
      %p81 = scmp.eq.s32.totalorder %s22, 1
      %p82 = por %p80, %p81
      %p83 = scmp.ne.s32.totalorder %s74, %s75
      %p84 = scmp.eq.s32.totalorder %s22, 0
      %p85 = por %p83, %p84
      %p86 = scmp.ne.s32.totalorder %s74, %s75
      %p87 = scmp.eq.s32.totalorder %s23, 1
      %p88 = por %p86, %p87
      %p90 = scmp.ne.s32.totalorder %s75, %s89
      %p91 = scmp.eq.s32.totalorder %s23, 0
      %p92 = por %p90, %p91
      %s94 = sadd.s32 %s93, 1
      %p97 = scmp.eq.s32.totalorder %s17, 1
      %p98 = scmp.ne.s32.totalorder %s93, %s95
      %p99 = scmp.eq.s32.totalorder %s17, 0
      %p100 = por %p98, %p99
      %p101 = scmp.ne.s32.totalorder %s93, %s95
      %p102 = scmp.eq.s32.totalorder %s22, 1
      %p103 = por %p101, %p102
      %p104 = scmp.ne.s32.totalorder %s95, %s96
      %p105 = scmp.eq.s32.totalorder %s22, 0
      %p106 = por %p104, %p105
      %p107 = scmp.ne.s32.totalorder %s95, %s96
      %p108 = scmp.eq.s32.totalorder %s23, 1
      %p109 = por %p107, %p108
      %p111 = scmp.ne.s32.totalorder %s96, %s110
      %p112 = scmp.eq.s32.totalorder %s23, 0
      %p113 = por %p111, %p112
      %s115 = sadd.s32 %s114, 1
      %p118 = scmp.eq.s32.totalorder %s17, 1
      %p119 = scmp.ne.s32.totalorder %s114, %s116
      %p120 = scmp.eq.s32.totalorder %s17, 0
      %p121 = por %p119, %p120
      %p122 = scmp.ne.s32.totalorder %s114, %s116
      %p123 = scmp.eq.s32.totalorder %s22, 1
      %p124 = por %p122, %p123
      %p125 = scmp.ne.s32.totalorder %s116, %s117
      %p126 = scmp.eq.s32.totalorder %s22, 0
      %p127 = por %p125, %p126
      %p128 = scmp.ne.s32.totalorder %s116, %s117
      %p129 = scmp.eq.s32.totalorder %s23, 1
      %p130 = por %p128, %p129
      %p132 = scmp.ne.s32.totalorder %s117, %s131
      %p133 = scmp.eq.s32.totalorder %s23, 0
      %p134 = por %p132, %p133
      %s136 = sadd.s32 %s135, 1
      %p139 = scmp.eq.s32.totalorder %s17, 1
      %p140 = scmp.ne.s32.totalorder %s135, %s137
      %p141 = scmp.eq.s32.totalorder %s17, 0
      %p142 = por %p140, %p141
      %p143 = scmp.ne.s32.totalorder %s135, %s137
      %p144 = scmp.eq.s32.totalorder %s22, 1
      %p145 = por %p143, %p144
      %p146 = scmp.ne.s32.totalorder %s137, %s138
      %p147 = scmp.eq.s32.totalorder %s22, 0
      %p148 = por %p146, %p147
      %p149 = scmp.ne.s32.totalorder %s137, %s138
      %p150 = scmp.eq.s32.totalorder %s23, 1
      %p151 = por %p149, %p150
      %p153 = scmp.ne.s32.totalorder %s138, %s152
      %p154 = scmp.eq.s32.totalorder %s23, 0
      %p155 = por %p153, %p154
      %s157 = sadd.s32 %s156, 1
      %p160 = scmp.eq.s32.totalorder %s17, 1
      %p161 = scmp.ne.s32.totalorder %s156, %s158
      %p162 = scmp.eq.s32.totalorder %s17, 0
      %p163 = por %p161, %p162
      %p164 = scmp.ne.s32.totalorder %s156, %s158
      %p165 = scmp.eq.s32.totalorder %s22, 1
      %p166 = por %p164, %p165
      %p167 = scmp.ne.s32.totalorder %s158, %s159
      %p168 = scmp.eq.s32.totalorder %s22, 0
      %p169 = por %p167, %p168
      %p170 = scmp.ne.s32.totalorder %s158, %s159
      %p171 = scmp.eq.s32.totalorder %s23, 1
      %p172 = por %p170, %p171
      %p174 = scmp.ne.s32.totalorder %s159, %s173
      %p175 = scmp.eq.s32.totalorder %s23, 0
      %p176 = por %p174, %p175
      %s177 = ssub.s32 %s17, %s24
      %p178 = scmp.eq.s32.totalorder %s177, 0
      %s180 = sadd.s32 %s179, 1
      %s181 = scalar_select %p178, %s179, %s180
      %p184 = pneg %p178
      %p185 = scmp.eq.s32.totalorder %s17, 1
      %p186 = por %p184, %p185
      %p187 = scmp.ne.s32.totalorder %s179, %s182
      %p188 = scmp.eq.s32.totalorder %s17, 0
      %p189 = por %p187, %p188
      %p190 = scmp.ne.s32.totalorder %s179, %s182
      %p191 = scmp.eq.s32.totalorder %s22, 1
      %p192 = por %p190, %p191
      %p193 = scmp.ne.s32.totalorder %s182, %s183
      %p194 = scmp.eq.s32.totalorder %s22, 0
      %p195 = por %p193, %p194
      %p196 = scmp.ne.s32.totalorder %s182, %s183
      %p197 = scmp.eq.s32.totalorder %s23, 1
      %p198 = por %p196, %p197
      %p200 = scmp.ne.s32.totalorder %s183, %s199
      %p201 = scmp.eq.s32.totalorder %s23, 0
      %p202 = por %p200, %p201
      %p203 = scmp.le.s32.totalorder 1, %s17
      %p204 = scmp.lt.s32.totalorder %s17, 3
      %p205 = pnand %p203, %p204
      %p206 = pneg %p205
      // Predicated region
      $region9: #{tpu_custom_call.1} parent=5 // pred_check
        _
      $region10: #{tpu_custom_call.1} parent=5 // pred_check_branch
        %208 = sbr.rel (%p205) target = $region12
      $region11: #{tpu_custom_call.1} parent=5 // pred_region
        %s209 = ssub.s32 %s17, 1
        // Predicated region
        $region13: #{tpu_custom_call.1} parent=11 // pred_check
          %p210 = pneg %p64
        $region14: #{tpu_custom_call.1} parent=11 // pred_check_branch
          %212 = sbr.rel (%p210) target = $region16
        $region15: #{tpu_custom_call.1} parent=11 // pred_region
          _
        $region16: #{tpu_custom_call.1} parent=11 // pred_fallthru
          _
        // Predicated region
        $region17: #{tpu_custom_call.1} parent=11 // pred_check
          %p213 = pneg %p85
        $region18: #{tpu_custom_call.1} parent=11 // pred_check_branch
          %215 = sbr.rel (%p213) target = $region20
        $region19: #{tpu_custom_call.1} parent=11 // pred_region
          _
        $region20: #{tpu_custom_call.1} parent=11 // pred_fallthru
          _
        // Predicated region
        $region21: #{tpu_custom_call.1} parent=11 // pred_check
          %p216 = pneg %p106
        $region22: #{tpu_custom_call.1} parent=11 // pred_check_branch
          %218 = sbr.rel (%p216) target = $region24
        $region23: #{tpu_custom_call.1} parent=11 // pred_region
          %220 = vsyncadd [#allocation5], 0
          %s221 = sshll.u32 %s3, 4
          %s222 = int_to_ptr.hbm [resolvable:$true] %s221
          %s223 = sshll.u32 [#allocation4], 4
          %s224 = int_to_ptr.vmem [resolvable:$true] %s223
          %229 = dma.hbm_to_vmem [thread:$0]  %s222, 4608, %s224, [#allocation5], 128, 128, 8
        $region24: #{tpu_custom_call.1} parent=11 // pred_fallthru
          _
        // Predicated region
        $region25: #{tpu_custom_call.1} parent=11 // pred_check
          %p230 = pneg %p127
        $region26: #{tpu_custom_call.1} parent=11 // pred_check_branch
          %232 = sbr.rel (%p230) target = $region28
        $region27: #{tpu_custom_call.1} parent=11 // pred_region
          _
        $region28: #{tpu_custom_call.1} parent=11 // pred_fallthru
          _
        // Predicated region
        $region29: #{tpu_custom_call.1} parent=11 // pred_check
          %p233 = pneg %p148
        $region30: #{tpu_custom_call.1} parent=11 // pred_check_branch
          %235 = sbr.rel (%p233) target = $region32
        $region31: #{tpu_custom_call.1} parent=11 // pred_region
          _
        $region32: #{tpu_custom_call.1} parent=11 // pred_fallthru
          _
        // Predicated region
        $region33: #{tpu_custom_call.1} parent=11 // pred_check
          %p236 = pneg %p169
        $region34: #{tpu_custom_call.1} parent=11 // pred_check_branch
          %238 = sbr.rel (%p236) target = $region36
        $region35: #{tpu_custom_call.1} parent=11 // pred_region
          _
        $region36: #{tpu_custom_call.1} parent=11 // pred_fallthru
          _
      $region12: #{tpu_custom_call.1} parent=5 // pred_fallthru
        _
      %p239 = scmp.lt.s32.totalorder %s17, 2
      // Predicated region
      $region37: #{tpu_custom_call.1} parent=5 // pred_check
        %p240 = pneg %p239
      $region38: #{tpu_custom_call.1} parent=5 // pred_check_branch
        %242 = sbr.rel (%p240) target = $region40
      $region39: #{tpu_custom_call.1} parent=5 // pred_region
        // Predicated region
        $region41: #{tpu_custom_call.1} parent=39 // pred_check
          %p243 = pneg %p37
        $region42: #{tpu_custom_call.1} parent=39 // pred_check_branch
          %245 = sbr.rel (%p243) target = $region44
        $region43: #{tpu_custom_call.1} parent=39 // pred_region
          %p246 = scmp.lt.s32.totalorder %s17, 1
          %s247 = scalar_select %p246, %s17, 1
          %s248 = smul.addr %s247, 8
          %s249 = smul.addr %s248, 8
          %s250 = scalar_lea.vmem %s0, %s249
        $region44: #{tpu_custom_call.1} parent=39 // pred_fallthru
          _
      $region40: #{tpu_custom_call.1} parent=5 // pred_fallthru
        _
      %p251 = scmp.le.s32.totalorder 1, %s17
      %p252 = scmp.lt.s32.totalorder %s17, 3
      %p253 = pnand %p251, %p252
      %p254 = pneg %p253
      // Predicated region
      $region45: #{tpu_custom_call.1} parent=5 // pred_check
        _
      $region46: #{tpu_custom_call.1} parent=5 // pred_check_branch
        %256 = sbr.rel (%p253) target = $region48
      $region47: #{tpu_custom_call.1} parent=5 // pred_region
        %s257 = ssub.s32 %s17, 1
        // Predicated region
        $region49: #{tpu_custom_call.1} parent=47 // pred_check
          %p258 = pneg %p106
        $region50: #{tpu_custom_call.1} parent=47 // pred_check_branch
          %260 = sbr.rel (%p258) target = $region52
        $region51: #{tpu_custom_call.1} parent=47 // pred_region
          %262 = dma.done [#allocation5], 4608
        $region52: #{tpu_custom_call.1} parent=47 // pred_fallthru
          _
        %p263 = scmp.lt.s32.totalorder %s22, 1
        %s264 = scalar_select %p263, %s22, 1
        %s265 = smul.addr %s264, 8
        %s266 = smul.addr %s265, 8
        %s267 = scalar_lea.vmem %s0, %s266
        %p268 = pneg %p43
        %p269 = pneg %p40
        %p270 = pneg %p64
        %p271 = pneg %p61
        %p272 = pneg %p85
        %p273 = pneg %p82
        %p274 = pneg %p106
        %p275 = pneg %p103
        %p276 = pneg %p127
        %p277 = pneg %p124
        %p278 = pneg %p148
        %p279 = pneg %p145
        %p280 = pneg %p169
        %p281 = pneg %p166
        %p282 = pneg %p195
        %p283 = pneg %p192
        %s284 = sand.u32 %s182, 1
        %s285 = scalar_lea.sflag [#allocation6], %s284
        %s286 = sand.u32 %s182, 1
        %s287 = smul.addr %s286, 64
        %s288 = scalar_lea.vmem [#allocation7], %s287
        %p289 = scmp.lt.s32.totalorder %s22, 1
        %s290 = scalar_select %p289, %s22, 1
        %s291 = smul.addr %s290, 8
        %s292 = smul.addr %s291, 8
        %s293 = scalar_lea.vmem %s0, %s292
        %v294 = vld [vmem:[%s293] sm:$0xff]
        %v295 = vld [vmem:[%s293 + $0x8] sm:$0xff]
        %v296 = vld [vmem:[%s293 + $0x10] sm:$0xff]
        %v297 = vld [vmem:[%s293 + $0x18] sm:$0xff]
        %v298 = vld [vmem:[%s293 + $0x20] sm:$0xff]
        %v299 = vld [vmem:[%s293 + $0x28] sm:$0xff]
        %v300 = vld [vmem:[%s293 + $0x30] sm:$0xff]
        %v301 = vld [vmem:[%s293 + $0x38] sm:$0xff]
        %v302 = vld [vmem:[%s1] sm:$0xff]
        %v303 = vld [vmem:[%s1 + $0x8] sm:$0xff]
        %v304 = vld [vmem:[%s1 + $0x10] sm:$0xff]
        %v305 = vld [vmem:[%s1 + $0x18] sm:$0xff]
        %v306 = vld [vmem:[%s1 + $0x20] sm:$0xff]
        %v307 = vld [vmem:[%s1 + $0x28] sm:$0xff]
        %v308 = vld [vmem:[%s1 + $0x30] sm:$0xff]
        %v309 = vld [vmem:[%s1 + $0x38] sm:$0xff]
        %v310 = vld [vmem:[%s1 + $0x40] sm:$0xff]
        %v311 = vld [vmem:[%s1 + $0x48] sm:$0xff]
        %v312 = vld [vmem:[%s1 + $0x50] sm:$0xff]
        %v313 = vld [vmem:[%s1 + $0x58] sm:$0xff]
        %v314 = vld [vmem:[%s1 + $0x60] sm:$0xff]
        %v315 = vld [vmem:[%s1 + $0x68] sm:$0xff]
        %v316 = vld [vmem:[%s1 + $0x70] sm:$0xff]
        %v317 = vld [vmem:[%s1 + $0x78] sm:$0xff]
        %v318 = vld [vmem:[%s2] sm:$0x1]
        %v320 = vperm.slane %v318, 0
        %322 = vmatpush.msra.mxu0 %v317
        %323 = vmatpush.msra.mxu0 %v316
        %324 = vmatpush.msra.mxu0 %v315
        %325 = vmatpush.msra.mxu0 %v314
        %326 = vmatpush.msra.mxu0 %v313
        %327 = vmatpush.msra.mxu0 %v312
        %328 = vmatpush.msra.mxu0 %v311
        %329 = vmatpush.msra.mxu0 %v310
        %330 = vmatpush.msra.mxu0 %v309
        %331 = vmatpush.msra.mxu0 %v308
        %332 = vmatpush.msra.mxu0 %v307
        %333 = vmatpush.msra.mxu0 %v306
        %334 = vmatpush.msra.mxu0 %v305
        %335 = vmatpush.msra.mxu0 %v304
        %336 = vmatpush.msra.mxu0 %v303
        %337 = vmatpush.msra.mxu0 %v302
        %338 = vmatmul.f32.gmra.mxu0 %v294
        %v339 = vpop.f32.mrf.mxu0
        %v340 = vadd.f32 %v320, %v339
        %341 = vmatmul.f32.gmra.mxu0 %v295
        %v342 = vpop.f32.mrf.mxu0
        %v343 = vadd.f32 %v320, %v342
        %344 = vmatmul.f32.gmra.mxu0 %v296
        %v345 = vpop.f32.mrf.mxu0
        %v346 = vadd.f32 %v320, %v345
        %347 = vmatmul.f32.gmra.mxu0 %v297
        %v348 = vpop.f32.mrf.mxu0
        %v349 = vadd.f32 %v320, %v348
        %350 = vmatmul.f32.gmra.mxu0 %v298
        %v351 = vpop.f32.mrf.mxu0
        %v352 = vadd.f32 %v320, %v351
        %353 = vmatmul.f32.gmra.mxu0 %v299
        %v354 = vpop.f32.mrf.mxu0
        %v355 = vadd.f32 %v320, %v354
        %356 = vmatmul.f32.gmra.mxu0 %v300
        %v357 = vpop.f32.mrf.mxu0
        %v358 = vadd.f32 %v320, %v357
        %359 = vmatmul.f32.gmra.mxu0 %v301
        %v360 = vpop.f32.mrf.mxu0
        %v361 = vadd.f32 %v320, %v360
        %362 = vdwg.mxu0
        %v363 = vmax.f32 %v340, 0.0
        %v364 = vmax.f32 %v343, 0.0
        %v365 = vmax.f32 %v346, 0.0
        %v366 = vmax.f32 %v349, 0.0
        %v367 = vmax.f32 %v352, 0.0
        %v368 = vmax.f32 %v355, 0.0
        %v369 = vmax.f32 %v358, 0.0
        %v370 = vmax.f32 %v361, 0.0
        %vm371 = vcmask 261120
        %372 = vst.msk [vmem:[#allocation2] sm:$0xff] %vm371, 0.0
        %373 = vst.msk [vmem:[#allocation2 + $0x8] sm:$0xff] %vm371, 0.0
        %374 = vst.msk [vmem:[#allocation2 + $0x10] sm:$0xff] %vm371, 0.0
        %375 = vst.msk [vmem:[#allocation2 + $0x18] sm:$0xff] %vm371, 0.0
        %376 = vst.msk [vmem:[#allocation2 + $0x20] sm:$0xff] %vm371, 0.0
        %377 = vst.msk [vmem:[#allocation2 + $0x28] sm:$0xff] %vm371, 0.0
        %378 = vst.msk [vmem:[#allocation2 + $0x30] sm:$0xff] %vm371, 0.0
        %379 = vst.msk [vmem:[#allocation2 + $0x38] sm:$0xff] %vm371, 0.0
        %380 = vst.msk [vmem:[#allocation2 + $0x40] sm:$0xff] %vm371, 0.0
        %381 = vst.msk [vmem:[#allocation2 + $0x48] sm:$0xff] %vm371, 0.0
        %vm382 = vcmask 254976
        %383 = vst.msk [vmem:[#allocation2 + $0x50] sm:$0x3] %vm382, 0.0
        %384 = vst.msk [vmem:[#allocation2 + $0x9] sm:$0xff] %vm371, %v363
        %385 = vst.msk [vmem:[#allocation2 + $0x11] sm:$0xff] %vm371, %v364
        %386 = vst.msk [vmem:[#allocation2 + $0x19] sm:$0xff] %vm371, %v365
        %387 = vst.msk [vmem:[#allocation2 + $0x21] sm:$0xff] %vm371, %v366
        %388 = vst.msk [vmem:[#allocation2 + $0x29] sm:$0xff] %vm371, %v367
        %389 = vst.msk [vmem:[#allocation2 + $0x31] sm:$0xff] %vm371, %v368
        %390 = vst.msk [vmem:[#allocation2 + $0x39] sm:$0xff] %vm371, %v369
        %391 = vst.msk [vmem:[#allocation2 + $0x41] sm:$0xff] %vm371, %v370
        %v392 = vlaneseq
        %v393 = vshrl.u32 %v392, 7
        %v394 = vadd.s32 %v393, 8
        %v395 = vadd.s32 %v393, 16
        %v396 = vadd.s32 %v393, 24
        %v397 = vadd.s32 %v393, 32
        %v398 = vadd.s32 %v393, 40
        %v399 = vadd.s32 %v393, 48
        %v400 = vadd.s32 %v393, 56
        %vm401 = vcmp.lt.s32.totalorder %v393, 0
        %v402 = vsub.s32 0, %v393
        %v403 = vsel %vm401, %v402, %v393
        %v404 = vshrl.u32 %v403, 3
        %v405 = vand.u32 %v403, 7
        %v406 = vsub.s32 0, %v405
        %v407 = vsel %vm401, %v406, %v405
        %vm408 = vcmp.lt.s32.totalorder %v394, 0
        %v409 = vsub.s32 0, %v394
        %v410 = vsel %vm408, %v409, %v394
        %v411 = vshrl.u32 %v410, 3
        %v412 = vand.u32 %v410, 7
        %v413 = vsub.s32 0, %v412
        %v414 = vsel %vm408, %v413, %v412
        %vm415 = vcmp.lt.s32.totalorder %v395, 0
        %v416 = vsub.s32 0, %v395
        %v417 = vsel %vm415, %v416, %v395
        %v418 = vshrl.u32 %v417, 3
        %v419 = vand.u32 %v417, 7
        %v420 = vsub.s32 0, %v419
        %v421 = vsel %vm415, %v420, %v419
        %vm422 = vcmp.lt.s32.totalorder %v396, 0
        %v423 = vsub.s32 0, %v396
        %v424 = vsel %vm422, %v423, %v396
        %v425 = vshrl.u32 %v424, 3
        %v426 = vand.u32 %v424, 7
        %v427 = vsub.s32 0, %v426
        %v428 = vsel %vm422, %v427, %v426
        %vm429 = vcmp.lt.s32.totalorder %v397, 0
        %v430 = vsub.s32 0, %v397
        %v431 = vsel %vm429, %v430, %v397
        %v432 = vshrl.u32 %v431, 3
        %v433 = vand.u32 %v431, 7
        %v434 = vsub.s32 0, %v433
        %v435 = vsel %vm429, %v434, %v433
        %vm436 = vcmp.lt.s32.totalorder %v398, 0
        %v437 = vsub.s32 0, %v398
        %v438 = vsel %vm436, %v437, %v398
        %v439 = vshrl.u32 %v438, 3
        %v440 = vand.u32 %v438, 7
        %v441 = vsub.s32 0, %v440
        %v442 = vsel %vm436, %v441, %v440
        %vm443 = vcmp.lt.s32.totalorder %v399, 0
        %v444 = vsub.s32 0, %v399
        %v445 = vsel %vm443, %v444, %v399
        %v446 = vshrl.u32 %v445, 3
        %v447 = vand.u32 %v445, 7
        %v448 = vsub.s32 0, %v447
        %v449 = vsel %vm443, %v448, %v447
        %vm450 = vcmp.lt.s32.totalorder %v400, 0
        %v451 = vsub.s32 0, %v400
        %v452 = vsel %vm450, %v451, %v400
        %v453 = vshrl.u32 %v452, 3
        %v454 = vand.u32 %v452, 7
        %v455 = vsub.s32 0, %v454
        %v456 = vsel %vm450, %v455, %v454
        %vm457 = vcmp.ne.s32.totalorder %v407, 0
        %vm458 = vcmp.ne.s32.totalorder %v414, 0
        %vm459 = vcmp.ne.s32.totalorder %v421, 0
        %vm460 = vcmp.ne.s32.totalorder %v428, 0
        %vm461 = vcmp.ne.s32.totalorder %v435, 0
        %vm462 = vcmp.ne.s32.totalorder %v442, 0
        %vm463 = vcmp.ne.s32.totalorder %v449, 0
        %vm464 = vcmp.ne.s32.totalorder %v456, 0
        %vm465 = vcmp.lt.s32.totalorder %v407, 0
        %vm466 = vcmp.lt.s32.totalorder %v414, 0
        %vm467 = vcmp.lt.s32.totalorder %v421, 0
        %vm468 = vcmp.lt.s32.totalorder %v428, 0
        %vm469 = vcmp.lt.s32.totalorder %v435, 0
        %vm470 = vcmp.lt.s32.totalorder %v442, 0
        %vm471 = vcmp.lt.s32.totalorder %v449, 0
        %vm472 = vcmp.lt.s32.totalorder %v456, 0
        %vm473 = vmand %vm465, %vm457
        %vm474 = vmand %vm466, %vm458
        %vm475 = vmand %vm467, %vm459
        %vm476 = vmand %vm468, %vm460
        %vm477 = vmand %vm469, %vm461
        %vm478 = vmand %vm470, %vm462
        %vm479 = vmand %vm471, %vm463
        %vm480 = vmand %vm472, %vm464
        %v481 = vadd.s32 %v407, 8
        %v482 = vadd.s32 %v414, 8
        %v483 = vadd.s32 %v421, 8
        %v484 = vadd.s32 %v428, 8
        %v485 = vadd.s32 %v435, 8
        %v486 = vadd.s32 %v442, 8
        %v487 = vadd.s32 %v449, 8
        %v488 = vadd.s32 %v456, 8
        %v489 = vsel %vm473, %v481, %v407
        %v490 = vsel %vm474, %v482, %v414
        %v491 = vsel %vm475, %v483, %v421
        %v492 = vsel %vm476, %v484, %v428
        %v493 = vsel %vm477, %v485, %v435
        %v494 = vsel %vm478, %v486, %v442
        %v495 = vsel %vm479, %v487, %v449
        %v496 = vsel %vm480, %v488, %v456
        %vm497 = vcmp.ne.s32.totalorder %v489, 0
        %vm498 = vcmp.ne.s32.totalorder %v490, 0
        %vm499 = vcmp.ne.s32.totalorder %v491, 0
        %vm500 = vcmp.ne.s32.totalorder %v492, 0
        %vm501 = vcmp.ne.s32.totalorder %v493, 0
        %vm502 = vcmp.ne.s32.totalorder %v494, 0
        %vm503 = vcmp.ne.s32.totalorder %v495, 0
        %vm504 = vcmp.ne.s32.totalorder %v496, 0
        %v505 = vsel %vm497, 1, 0
        %v506 = vsel %vm498, 1, 0
        %v507 = vsel %vm499, 1, 0
        %v508 = vsel %vm500, 1, 0
        %v509 = vsel %vm501, 1, 0
        %v510 = vsel %vm502, 1, 0
        %v511 = vsel %vm503, 1, 0
        %v512 = vsel %vm504, 1, 0
        %v513 = vcvt.s32.f32 %v505
        %v514 = vcvt.s32.f32 %v506
        %v515 = vcvt.s32.f32 %v507
        %v516 = vcvt.s32.f32 %v508
        %v517 = vcvt.s32.f32 %v509
        %v518 = vcvt.s32.f32 %v510
        %v519 = vcvt.s32.f32 %v511
        %v520 = vcvt.s32.f32 %v512
        %vm521 = vcmp.ne.s32.totalorder %v489, 7
        %vm522 = vcmp.ne.s32.totalorder %v490, 7
        %vm523 = vcmp.ne.s32.totalorder %v491, 7
        %vm524 = vcmp.ne.s32.totalorder %v492, 7
        %vm525 = vcmp.ne.s32.totalorder %v493, 7
        %vm526 = vcmp.ne.s32.totalorder %v494, 7
        %vm527 = vcmp.ne.s32.totalorder %v495, 7
        %vm528 = vcmp.ne.s32.totalorder %v496, 7
        %v529 = vsel %vm521, 1, 0
        %v530 = vsel %vm522, 1, 0
        %v531 = vsel %vm523, 1, 0
        %v532 = vsel %vm524, 1, 0
        %v533 = vsel %vm525, 1, 0
        %v534 = vsel %vm526, 1, 0
        %v535 = vsel %vm527, 1, 0
        %v536 = vsel %vm528, 1, 0
        %v537 = vcvt.s32.f32 %v529
        %v538 = vcvt.s32.f32 %v530
        %v539 = vcvt.s32.f32 %v531
        %v540 = vcvt.s32.f32 %v532
        %v541 = vcvt.s32.f32 %v533
        %v542 = vcvt.s32.f32 %v534
        %v543 = vcvt.s32.f32 %v535
        %v544 = vcvt.s32.f32 %v536
        %545 = vst.msk [vmem:[#allocation3] sm:$0xff] %vm371, 0.0
        %546 = vst.msk [vmem:[#allocation3 + $0x8] sm:$0xff] %vm371, 0.0
        %547 = vst.msk [vmem:[#allocation3 + $0x10] sm:$0xff] %vm371, 0.0
        %548 = vst.msk [vmem:[#allocation3 + $0x18] sm:$0xff] %vm371, 0.0
        %549 = vst.msk [vmem:[#allocation3 + $0x20] sm:$0xff] %vm371, 0.0
        %550 = vst.msk [vmem:[#allocation3 + $0x28] sm:$0xff] %vm371, 0.0
        %551 = vst.msk [vmem:[#allocation3 + $0x30] sm:$0xff] %vm371, 0.0
        %552 = vst.msk [vmem:[#allocation3 + $0x38] sm:$0xff] %vm371, 0.0
        %v553 = vld [vmem:[#allocation2] sm:$0xff]
        %v554 = vld [vmem:[#allocation2 + $0x8] sm:$0xff]
        %v555 = vld [vmem:[#allocation2 + $0x10] sm:$0xff]
        %v556 = vld [vmem:[#allocation2 + $0x18] sm:$0xff]
        %v557 = vld [vmem:[#allocation2 + $0x20] sm:$0xff]
        %v558 = vld [vmem:[#allocation2 + $0x28] sm:$0xff]
        %v559 = vld [vmem:[#allocation2 + $0x30] sm:$0xff]
        %v560 = vld [vmem:[#allocation2 + $0x38] sm:$0xff]
        %v561 = vmul.f32 %v553, %v513
        %v562 = vmul.f32 %v554, %v514
        %v563 = vmul.f32 %v555, %v515
        %v564 = vmul.f32 %v556, %v516
        %v565 = vmul.f32 %v557, %v517
        %v566 = vmul.f32 %v558, %v518
        %v567 = vmul.f32 %v559, %v519
        %v568 = vmul.f32 %v560, %v520
        %v569 = vld [vmem:[#allocation3] sm:$0xff]
        %v570 = vld [vmem:[#allocation3 + $0x8] sm:$0xff]
        %v571 = vld [vmem:[#allocation3 + $0x10] sm:$0xff]
        %v572 = vld [vmem:[#allocation3 + $0x18] sm:$0xff]
        %v573 = vld [vmem:[#allocation3 + $0x20] sm:$0xff]
        %v574 = vld [vmem:[#allocation3 + $0x28] sm:$0xff]
        %v575 = vld [vmem:[#allocation3 + $0x30] sm:$0xff]
        %v576 = vld [vmem:[#allocation3 + $0x38] sm:$0xff]
        %v577 = vld [vmem:[#allocation4] sm:$0xff]
        %v578 = vld [vmem:[#allocation4 + $0x8] sm:$0xff]
        %v579 = vld [vmem:[#allocation4 + $0x10] sm:$0xff]
        %v580 = vld [vmem:[#allocation4 + $0x18] sm:$0xff]
        %v582 = vsel %vm371, %v561, 0
        %v585 = vsel %vm371, %v562, 0
        %v588 = vsel %vm371, %v563, 0
        %v591 = vsel %vm371, %v564, 0
        %v594 = vsel %vm371, %v565, 0
        %v597 = vsel %vm371, %v566, 0
        %v600 = vsel %vm371, %v567, 0
        %v603 = vsel %vm371, %v568, 0
        %605 = vmatpush.msra.mxu0 0.0
        %606 = vmatpush.msra.mxu0 0.0
        %607 = vmatpush.msra.mxu0 0.0
        %608 = vmatpush.msra.mxu0 0.0
        %609 = vmatpush.msra.mxu0 0.0
        %610 = vmatpush.msra.mxu0 0.0
        %611 = vmatpush.msra.mxu0 0.0
        %612 = vmatpush.msra.mxu0 0.0
        %613 = vmatpush.msra.mxu0 0.0
        %614 = vmatpush.msra.mxu0 0.0
        %615 = vmatpush.msra.mxu0 0.0
        %616 = vmatpush.msra.mxu0 0.0
        %617 = vmatpush.msra.mxu0 %v580
        %618 = vmatpush.msra.mxu0 %v579
        %619 = vmatpush.msra.mxu0 %v578
        %620 = vmatpush.msra.mxu0 %v577
        %621 = vmatmul.f32.gmra.mxu0 %v582
        %v622 = vpop.f32.mrf.mxu0
        %v623 = vadd.f32 0.0, %v622
        %624 = vmatmul.f32.gmra.mxu0 %v585
        %v625 = vpop.f32.mrf.mxu0
        %v626 = vadd.f32 0.0, %v625
        %627 = vmatmul.f32.gmra.mxu0 %v588
        %v628 = vpop.f32.mrf.mxu0
        %v629 = vadd.f32 0.0, %v628
        %630 = vmatmul.f32.gmra.mxu0 %v591
        %v631 = vpop.f32.mrf.mxu0
        %v632 = vadd.f32 0.0, %v631
        %633 = vmatmul.f32.gmra.mxu0 %v594
        %v634 = vpop.f32.mrf.mxu0
        %v635 = vadd.f32 0.0, %v634
        %636 = vmatmul.f32.gmra.mxu0 %v597
        %v637 = vpop.f32.mrf.mxu0
        %v638 = vadd.f32 0.0, %v637
        %639 = vmatmul.f32.gmra.mxu0 %v600
        %v640 = vpop.f32.mrf.mxu0
        %v641 = vadd.f32 0.0, %v640
        %642 = vmatmul.f32.gmra.mxu0 %v603
        %v643 = vpop.f32.mrf.mxu0
        %v644 = vadd.f32 0.0, %v643
        %645 = vdwg.mxu0
        %v646 = vadd.f32 %v569, %v623
        %v647 = vadd.f32 %v570, %v626
        %v648 = vadd.f32 %v571, %v629
        %v649 = vadd.f32 %v572, %v632
        %v650 = vadd.f32 %v573, %v635
        %v651 = vadd.f32 %v574, %v638
        %v652 = vadd.f32 %v575, %v641
        %v653 = vadd.f32 %v576, %v644
        %654 = vst.msk [vmem:[#allocation3] sm:$0xff] %vm371, %v646
        %655 = vst.msk [vmem:[#allocation3 + $0x8] sm:$0xff] %vm371, %v647
        %656 = vst.msk [vmem:[#allocation3 + $0x10] sm:$0xff] %vm371, %v648
        %657 = vst.msk [vmem:[#allocation3 + $0x18] sm:$0xff] %vm371, %v649
        %658 = vst.msk [vmem:[#allocation3 + $0x20] sm:$0xff] %vm371, %v650
        %659 = vst.msk [vmem:[#allocation3 + $0x28] sm:$0xff] %vm371, %v651
        %660 = vst.msk [vmem:[#allocation3 + $0x30] sm:$0xff] %vm371, %v652
        %661 = vst.msk [vmem:[#allocation3 + $0x38] sm:$0xff] %vm371, %v653
        %v662 = vld [vmem:[#allocation2 + $0x1] sm:$0xff]
        %v663 = vld [vmem:[#allocation2 + $0x9] sm:$0xff]
        %v664 = vld [vmem:[#allocation2 + $0x11] sm:$0xff]
        %v665 = vld [vmem:[#allocation2 + $0x19] sm:$0xff]
        %v666 = vld [vmem:[#allocation2 + $0x21] sm:$0xff]
        %v667 = vld [vmem:[#allocation2 + $0x29] sm:$0xff]
        %v668 = vld [vmem:[#allocation2 + $0x31] sm:$0xff]
        %v669 = vld [vmem:[#allocation2 + $0x39] sm:$0xff]
        %v670 = vld [vmem:[#allocation3] sm:$0xff]
        %v671 = vld [vmem:[#allocation3 + $0x8] sm:$0xff]
        %v672 = vld [vmem:[#allocation3 + $0x10] sm:$0xff]
        %v673 = vld [vmem:[#allocation3 + $0x18] sm:$0xff]
        %v674 = vld [vmem:[#allocation3 + $0x20] sm:$0xff]
        %v675 = vld [vmem:[#allocation3 + $0x28] sm:$0xff]
        %v676 = vld [vmem:[#allocation3 + $0x30] sm:$0xff]
        %v677 = vld [vmem:[#allocation3 + $0x38] sm:$0xff]
        %s678 = scalar_lea.vmem [#allocation4], 32
        %v679 = vld [vmem:[%s678] sm:$0xff]
        %v680 = vld [vmem:[%s678 + $0x8] sm:$0xff]
        %v681 = vld [vmem:[%s678 + $0x10] sm:$0xff]
        %v682 = vld [vmem:[%s678 + $0x18] sm:$0xff]
        %v684 = vsel %vm371, %v662, 0
        %v687 = vsel %vm371, %v663, 0
        %v690 = vsel %vm371, %v664, 0
        %v693 = vsel %vm371, %v665, 0
        %v696 = vsel %vm371, %v666, 0
        %v699 = vsel %vm371, %v667, 0
        %v702 = vsel %vm371, %v668, 0
        %v705 = vsel %vm371, %v669, 0
        %707 = vmatpush.msra.mxu0 0.0
        %708 = vmatpush.msra.mxu0 0.0
        %709 = vmatpush.msra.mxu0 0.0
        %710 = vmatpush.msra.mxu0 0.0
        %711 = vmatpush.msra.mxu0 0.0
        %712 = vmatpush.msra.mxu0 0.0
        %713 = vmatpush.msra.mxu0 0.0
        %714 = vmatpush.msra.mxu0 0.0
        %715 = vmatpush.msra.mxu0 0.0
        %716 = vmatpush.msra.mxu0 0.0
        %717 = vmatpush.msra.mxu0 0.0
        %718 = vmatpush.msra.mxu0 0.0
        %719 = vmatpush.msra.mxu0 %v682
        %720 = vmatpush.msra.mxu0 %v681
        %721 = vmatpush.msra.mxu0 %v680
        %722 = vmatpush.msra.mxu0 %v679
        %723 = vmatmul.f32.gmra.mxu0 %v684
        %v724 = vpop.f32.mrf.mxu0
        %v725 = vadd.f32 0.0, %v724
        %726 = vmatmul.f32.gmra.mxu0 %v687
        %v727 = vpop.f32.mrf.mxu0
        %v728 = vadd.f32 0.0, %v727
        %729 = vmatmul.f32.gmra.mxu0 %v690
        %v730 = vpop.f32.mrf.mxu0
        %v731 = vadd.f32 0.0, %v730
        %732 = vmatmul.f32.gmra.mxu0 %v693
        %v733 = vpop.f32.mrf.mxu0
        %v734 = vadd.f32 0.0, %v733
        %735 = vmatmul.f32.gmra.mxu0 %v696
        %v736 = vpop.f32.mrf.mxu0
        %v737 = vadd.f32 0.0, %v736
        %738 = vmatmul.f32.gmra.mxu0 %v699
        %v739 = vpop.f32.mrf.mxu0
        %v740 = vadd.f32 0.0, %v739
        %741 = vmatmul.f32.gmra.mxu0 %v702
        %v742 = vpop.f32.mrf.mxu0
        %v743 = vadd.f32 0.0, %v742
        %744 = vmatmul.f32.gmra.mxu0 %v705
        %v745 = vpop.f32.mrf.mxu0
        %v746 = vadd.f32 0.0, %v745
        %747 = vdwg.mxu0
        %v748 = vadd.f32 %v670, %v725
        %v749 = vadd.f32 %v671, %v728
        %v750 = vadd.f32 %v672, %v731
        %v751 = vadd.f32 %v673, %v734
        %v752 = vadd.f32 %v674, %v737
        %v753 = vadd.f32 %v675, %v740
        %v754 = vadd.f32 %v676, %v743
        %v755 = vadd.f32 %v677, %v746
        %756 = vst.msk [vmem:[#allocation3] sm:$0xff] %vm371, %v748
        %757 = vst.msk [vmem:[#allocation3 + $0x8] sm:$0xff] %vm371, %v749
        %758 = vst.msk [vmem:[#allocation3 + $0x10] sm:$0xff] %vm371, %v750
        %759 = vst.msk [vmem:[#allocation3 + $0x18] sm:$0xff] %vm371, %v751
        %760 = vst.msk [vmem:[#allocation3 + $0x20] sm:$0xff] %vm371, %v752
        %761 = vst.msk [vmem:[#allocation3 + $0x28] sm:$0xff] %vm371, %v753
        %762 = vst.msk [vmem:[#allocation3 + $0x30] sm:$0xff] %vm371, %v754
        %763 = vst.msk [vmem:[#allocation3 + $0x38] sm:$0xff] %vm371, %v755
        %v764 = vld [vmem:[#allocation2 + $0x2] sm:$0xff]
        %v765 = vld [vmem:[#allocation2 + $0xa] sm:$0xff]
        %v766 = vld [vmem:[#allocation2 + $0x12] sm:$0xff]
        %v767 = vld [vmem:[#allocation2 + $0x1a] sm:$0xff]
        %v768 = vld [vmem:[#allocation2 + $0x22] sm:$0xff]
        %v769 = vld [vmem:[#allocation2 + $0x2a] sm:$0xff]
        %v770 = vld [vmem:[#allocation2 + $0x32] sm:$0xff]
        %v771 = vld [vmem:[#allocation2 + $0x3a] sm:$0xff]
        %v772 = vmul.f32 %v764, %v537
        %v773 = vmul.f32 %v765, %v538
        %v774 = vmul.f32 %v766, %v539
        %v775 = vmul.f32 %v767, %v540
        %v776 = vmul.f32 %v768, %v541
        %v777 = vmul.f32 %v769, %v542
        %v778 = vmul.f32 %v770, %v543
        %v779 = vmul.f32 %v771, %v544
        %v780 = vld [vmem:[#allocation3] sm:$0xff]
        %v781 = vld [vmem:[#allocation3 + $0x8] sm:$0xff]
        %v782 = vld [vmem:[#allocation3 + $0x10] sm:$0xff]
        %v783 = vld [vmem:[#allocation3 + $0x18] sm:$0xff]
        %v784 = vld [vmem:[#allocation3 + $0x20] sm:$0xff]
        %v785 = vld [vmem:[#allocation3 + $0x28] sm:$0xff]
        %v786 = vld [vmem:[#allocation3 + $0x30] sm:$0xff]
        %v787 = vld [vmem:[#allocation3 + $0x38] sm:$0xff]
        %s788 = scalar_lea.vmem [#allocation4], 64
        %v789 = vld [vmem:[%s788] sm:$0xff]
        %v790 = vld [vmem:[%s788 + $0x8] sm:$0xff]
        %v791 = vld [vmem:[%s788 + $0x10] sm:$0xff]
        %v792 = vld [vmem:[%s788 + $0x18] sm:$0xff]
        %v794 = vsel %vm371, %v772, 0
        %v797 = vsel %vm371, %v773, 0
        %v800 = vsel %vm371, %v774, 0
        %v803 = vsel %vm371, %v775, 0
        %v806 = vsel %vm371, %v776, 0
        %v809 = vsel %vm371, %v777, 0
        %v812 = vsel %vm371, %v778, 0
        %v815 = vsel %vm371, %v779, 0
        %817 = vmatpush.msra.mxu0 0.0
        %818 = vmatpush.msra.mxu0 0.0
        %819 = vmatpush.msra.mxu0 0.0
        %820 = vmatpush.msra.mxu0 0.0
        %821 = vmatpush.msra.mxu0 0.0
        %822 = vmatpush.msra.mxu0 0.0
        %823 = vmatpush.msra.mxu0 0.0
        %824 = vmatpush.msra.mxu0 0.0
        %825 = vmatpush.msra.mxu0 0.0
        %826 = vmatpush.msra.mxu0 0.0
        %827 = vmatpush.msra.mxu0 0.0
        %828 = vmatpush.msra.mxu0 0.0
        %829 = vmatpush.msra.mxu0 %v792
        %830 = vmatpush.msra.mxu0 %v791
        %831 = vmatpush.msra.mxu0 %v790
        %832 = vmatpush.msra.mxu0 %v789
        %833 = vmatmul.f32.gmra.mxu0 %v794
        %v834 = vpop.f32.mrf.mxu0
        %v835 = vadd.f32 0.0, %v834
        %836 = vmatmul.f32.gmra.mxu0 %v797
        %v837 = vpop.f32.mrf.mxu0
        %v838 = vadd.f32 0.0, %v837
        %839 = vmatmul.f32.gmra.mxu0 %v800
        %v840 = vpop.f32.mrf.mxu0
        %v841 = vadd.f32 0.0, %v840
        %842 = vmatmul.f32.gmra.mxu0 %v803
        %v843 = vpop.f32.mrf.mxu0
        %v844 = vadd.f32 0.0, %v843
        %845 = vmatmul.f32.gmra.mxu0 %v806
        %v846 = vpop.f32.mrf.mxu0
        %v847 = vadd.f32 0.0, %v846
        %848 = vmatmul.f32.gmra.mxu0 %v809
        %v849 = vpop.f32.mrf.mxu0
        %v850 = vadd.f32 0.0, %v849
        %851 = vmatmul.f32.gmra.mxu0 %v812
        %v852 = vpop.f32.mrf.mxu0
        %v853 = vadd.f32 0.0, %v852
        %854 = vmatmul.f32.gmra.mxu0 %v815
        %v855 = vpop.f32.mrf.mxu0
        %v856 = vadd.f32 0.0, %v855
        %857 = vdwg.mxu0
        %v858 = vadd.f32 %v780, %v835
        %v859 = vadd.f32 %v781, %v838
        %v860 = vadd.f32 %v782, %v841
        %v861 = vadd.f32 %v783, %v844
        %v862 = vadd.f32 %v784, %v847
        %v863 = vadd.f32 %v785, %v850
        %v864 = vadd.f32 %v786, %v853
        %v865 = vadd.f32 %v787, %v856
        %866 = vst.msk [vmem:[#allocation3] sm:$0xff] %vm371, %v858
        %867 = vst.msk [vmem:[#allocation3 + $0x8] sm:$0xff] %vm371, %v859
        %868 = vst.msk [vmem:[#allocation3 + $0x10] sm:$0xff] %vm371, %v860
        %869 = vst.msk [vmem:[#allocation3 + $0x18] sm:$0xff] %vm371, %v861
        %870 = vst.msk [vmem:[#allocation3 + $0x20] sm:$0xff] %vm371, %v862
        %871 = vst.msk [vmem:[#allocation3 + $0x28] sm:$0xff] %vm371, %v863
        %872 = vst.msk [vmem:[#allocation3 + $0x30] sm:$0xff] %vm371, %v864
        %873 = vst.msk [vmem:[#allocation3 + $0x38] sm:$0xff] %vm371, %v865
        %v874 = vld [vmem:[#allocation2 + $0x8] sm:$0xff]
        %v875 = vld [vmem:[#allocation2 + $0x10] sm:$0xff]
        %v876 = vld [vmem:[#allocation2 + $0x18] sm:$0xff]
        %v877 = vld [vmem:[#allocation2 + $0x20] sm:$0xff]
        %v878 = vld [vmem:[#allocation2 + $0x28] sm:$0xff]
        %v879 = vld [vmem:[#allocation2 + $0x30] sm:$0xff]
        %v880 = vld [vmem:[#allocation2 + $0x38] sm:$0xff]
        %v881 = vld [vmem:[#allocation2 + $0x40] sm:$0xff]
        %v882 = vmul.f32 %v874, %v513
        %v883 = vmul.f32 %v875, %v514
        %v884 = vmul.f32 %v876, %v515
        %v885 = vmul.f32 %v877, %v516
        %v886 = vmul.f32 %v878, %v517
        %v887 = vmul.f32 %v879, %v518
        %v888 = vmul.f32 %v880, %v519
        %v889 = vmul.f32 %v881, %v520
        %v890 = vld [vmem:[#allocation3] sm:$0xff]
        %v891 = vld [vmem:[#allocation3 + $0x8] sm:$0xff]
        %v892 = vld [vmem:[#allocation3 + $0x10] sm:$0xff]
        %v893 = vld [vmem:[#allocation3 + $0x18] sm:$0xff]
        %v894 = vld [vmem:[#allocation3 + $0x20] sm:$0xff]
        %v895 = vld [vmem:[#allocation3 + $0x28] sm:$0xff]
        %v896 = vld [vmem:[#allocation3 + $0x30] sm:$0xff]
        %v897 = vld [vmem:[#allocation3 + $0x38] sm:$0xff]
        %s898 = scalar_lea.vmem [#allocation4], 96
        %v899 = vld [vmem:[%s898] sm:$0xff]
        %v900 = vld [vmem:[%s898 + $0x8] sm:$0xff]
        %v901 = vld [vmem:[%s898 + $0x10] sm:$0xff]
        %v902 = vld [vmem:[%s898 + $0x18] sm:$0xff]
        %v904 = vsel %vm371, %v882, 0
        %v907 = vsel %vm371, %v883, 0
        %v910 = vsel %vm371, %v884, 0
        %v913 = vsel %vm371, %v885, 0
        %v916 = vsel %vm371, %v886, 0
        %v919 = vsel %vm371, %v887, 0
        %v922 = vsel %vm371, %v888, 0
        %v925 = vsel %vm371, %v889, 0
        %927 = vmatpush.msra.mxu0 0.0
        %928 = vmatpush.msra.mxu0 0.0
        %929 = vmatpush.msra.mxu0 0.0
        %930 = vmatpush.msra.mxu0 0.0
        %931 = vmatpush.msra.mxu0 0.0
        %932 = vmatpush.msra.mxu0 0.0
        %933 = vmatpush.msra.mxu0 0.0
        %934 = vmatpush.msra.mxu0 0.0
        %935 = vmatpush.msra.mxu0 0.0
        %936 = vmatpush.msra.mxu0 0.0
        %937 = vmatpush.msra.mxu0 0.0
        %938 = vmatpush.msra.mxu0 0.0
        %939 = vmatpush.msra.mxu0 %v902
        %940 = vmatpush.msra.mxu0 %v901
        %941 = vmatpush.msra.mxu0 %v900
        %942 = vmatpush.msra.mxu0 %v899
        %943 = vmatmul.f32.gmra.mxu0 %v904
        %v944 = vpop.f32.mrf.mxu0
        %v945 = vadd.f32 0.0, %v944
        %946 = vmatmul.f32.gmra.mxu0 %v907
        %v947 = vpop.f32.mrf.mxu0
        %v948 = vadd.f32 0.0, %v947
        %949 = vmatmul.f32.gmra.mxu0 %v910
        %v950 = vpop.f32.mrf.mxu0
        %v951 = vadd.f32 0.0, %v950
        %952 = vmatmul.f32.gmra.mxu0 %v913
        %v953 = vpop.f32.mrf.mxu0
        %v954 = vadd.f32 0.0, %v953
        %955 = vmatmul.f32.gmra.mxu0 %v916
        %v956 = vpop.f32.mrf.mxu0
        %v957 = vadd.f32 0.0, %v956
        %958 = vmatmul.f32.gmra.mxu0 %v919
        %v959 = vpop.f32.mrf.mxu0
        %v960 = vadd.f32 0.0, %v959
        %961 = vmatmul.f32.gmra.mxu0 %v922
        %v962 = vpop.f32.mrf.mxu0
        %v963 = vadd.f32 0.0, %v962
        %964 = vmatmul.f32.gmra.mxu0 %v925
        %v965 = vpop.f32.mrf.mxu0
        %v966 = vadd.f32 0.0, %v965
        %967 = vdwg.mxu0
        %v968 = vadd.f32 %v890, %v945
        %v969 = vadd.f32 %v891, %v948
        %v970 = vadd.f32 %v892, %v951
        %v971 = vadd.f32 %v893, %v954
        %v972 = vadd.f32 %v894, %v957
        %v973 = vadd.f32 %v895, %v960
        %v974 = vadd.f32 %v896, %v963
        %v975 = vadd.f32 %v897, %v966
        %976 = vst.msk [vmem:[#allocation3] sm:$0xff] %vm371, %v968
        %977 = vst.msk [vmem:[#allocation3 + $0x8] sm:$0xff] %vm371, %v969
        %978 = vst.msk [vmem:[#allocation3 + $0x10] sm:$0xff] %vm371, %v970
        %979 = vst.msk [vmem:[#allocation3 + $0x18] sm:$0xff] %vm371, %v971
        %980 = vst.msk [vmem:[#allocation3 + $0x20] sm:$0xff] %vm371, %v972
        %981 = vst.msk [vmem:[#allocation3 + $0x28] sm:$0xff] %vm371, %v973
        %982 = vst.msk [vmem:[#allocation3 + $0x30] sm:$0xff] %vm371, %v974
        %983 = vst.msk [vmem:[#allocation3 + $0x38] sm:$0xff] %vm371, %v975
        %v984 = vld [vmem:[#allocation2 + $0x9] sm:$0xff]
        %v985 = vld [vmem:[#allocation2 + $0x11] sm:$0xff]
        %v986 = vld [vmem:[#allocation2 + $0x19] sm:$0xff]
        %v987 = vld [vmem:[#allocation2 + $0x21] sm:$0xff]
        %v988 = vld [vmem:[#allocation2 + $0x29] sm:$0xff]
        %v989 = vld [vmem:[#allocation2 + $0x31] sm:$0xff]
        %v990 = vld [vmem:[#allocation2 + $0x39] sm:$0xff]
        %v991 = vld [vmem:[#allocation2 + $0x41] sm:$0xff]
        %v992 = vld [vmem:[#allocation3] sm:$0xff]
        %v993 = vld [vmem:[#allocation3 + $0x8] sm:$0xff]
        %v994 = vld [vmem:[#allocation3 + $0x10] sm:$0xff]
        %v995 = vld [vmem:[#allocation3 + $0x18] sm:$0xff]
        %v996 = vld [vmem:[#allocation3 + $0x20] sm:$0xff]
        %v997 = vld [vmem:[#allocation3 + $0x28] sm:$0xff]
        %v998 = vld [vmem:[#allocation3 + $0x30] sm:$0xff]
        %v999 = vld [vmem:[#allocation3 + $0x38] sm:$0xff]
        %s1000 = scalar_lea.vmem [#allocation4], 128
        %v1001 = vld [vmem:[%s1000] sm:$0xff]
        %v1002 = vld [vmem:[%s1000 + $0x8] sm:$0xff]
        %v1003 = vld [vmem:[%s1000 + $0x10] sm:$0xff]
        %v1004 = vld [vmem:[%s1000 + $0x18] sm:$0xff]
        %v1006 = vsel %vm371, %v984, 0
        %v1009 = vsel %vm371, %v985, 0
        %v1012 = vsel %vm371, %v986, 0
        %v1015 = vsel %vm371, %v987, 0
        %v1018 = vsel %vm371, %v988, 0
        %v1021 = vsel %vm371, %v989, 0
        %v1024 = vsel %vm371, %v990, 0
        %v1027 = vsel %vm371, %v991, 0
        %1029 = vmatpush.msra.mxu0 0.0
        %1030 = vmatpush.msra.mxu0 0.0
        %1031 = vmatpush.msra.mxu0 0.0
        %1032 = vmatpush.msra.mxu0 0.0
        %1033 = vmatpush.msra.mxu0 0.0
        %1034 = vmatpush.msra.mxu0 0.0
        %1035 = vmatpush.msra.mxu0 0.0
        %1036 = vmatpush.msra.mxu0 0.0
        %1037 = vmatpush.msra.mxu0 0.0
        %1038 = vmatpush.msra.mxu0 0.0
        %1039 = vmatpush.msra.mxu0 0.0
        %1040 = vmatpush.msra.mxu0 0.0
        %1041 = vmatpush.msra.mxu0 %v1004
        %1042 = vmatpush.msra.mxu0 %v1003
        %1043 = vmatpush.msra.mxu0 %v1002
        %1044 = vmatpush.msra.mxu0 %v1001
        %1045 = vmatmul.f32.gmra.mxu0 %v1006
        %v1046 = vpop.f32.mrf.mxu0
        %v1047 = vadd.f32 0.0, %v1046
        %1048 = vmatmul.f32.gmra.mxu0 %v1009
        %v1049 = vpop.f32.mrf.mxu0
        %v1050 = vadd.f32 0.0, %v1049
        %1051 = vmatmul.f32.gmra.mxu0 %v1012
        %v1052 = vpop.f32.mrf.mxu0
        %v1053 = vadd.f32 0.0, %v1052
        %1054 = vmatmul.f32.gmra.mxu0 %v1015
        %v1055 = vpop.f32.mrf.mxu0
        %v1056 = vadd.f32 0.0, %v1055
        %1057 = vmatmul.f32.gmra.mxu0 %v1018
        %v1058 = vpop.f32.mrf.mxu0
        %v1059 = vadd.f32 0.0, %v1058
        %1060 = vmatmul.f32.gmra.mxu0 %v1021
        %v1061 = vpop.f32.mrf.mxu0
        %v1062 = vadd.f32 0.0, %v1061
        %1063 = vmatmul.f32.gmra.mxu0 %v1024
        %v1064 = vpop.f32.mrf.mxu0
        %v1065 = vadd.f32 0.0, %v1064
        %1066 = vmatmul.f32.gmra.mxu0 %v1027
        %v1067 = vpop.f32.mrf.mxu0
        %v1068 = vadd.f32 0.0, %v1067
        %1069 = vdwg.mxu0
        %v1070 = vadd.f32 %v992, %v1047
        %v1071 = vadd.f32 %v993, %v1050
        %v1072 = vadd.f32 %v994, %v1053
        %v1073 = vadd.f32 %v995, %v1056
        %v1074 = vadd.f32 %v996, %v1059
        %v1075 = vadd.f32 %v997, %v1062
        %v1076 = vadd.f32 %v998, %v1065
        %v1077 = vadd.f32 %v999, %v1068
        %1078 = vst.msk [vmem:[#allocation3] sm:$0xff] %vm371, %v1070
        %1079 = vst.msk [vmem:[#allocation3 + $0x8] sm:$0xff] %vm371, %v1071
        %1080 = vst.msk [vmem:[#allocation3 + $0x10] sm:$0xff] %vm371, %v1072
        %1081 = vst.msk [vmem:[#allocation3 + $0x18] sm:$0xff] %vm371, %v1073
        %1082 = vst.msk [vmem:[#allocation3 + $0x20] sm:$0xff] %vm371, %v1074
        %1083 = vst.msk [vmem:[#allocation3 + $0x28] sm:$0xff] %vm371, %v1075
        %1084 = vst.msk [vmem:[#allocation3 + $0x30] sm:$0xff] %vm371, %v1076
        %1085 = vst.msk [vmem:[#allocation3 + $0x38] sm:$0xff] %vm371, %v1077
        %v1086 = vld [vmem:[#allocation2 + $0xa] sm:$0xff]
        %v1087 = vld [vmem:[#allocation2 + $0x12] sm:$0xff]
        %v1088 = vld [vmem:[#allocation2 + $0x1a] sm:$0xff]
        %v1089 = vld [vmem:[#allocation2 + $0x22] sm:$0xff]
        %v1090 = vld [vmem:[#allocation2 + $0x2a] sm:$0xff]
        %v1091 = vld [vmem:[#allocation2 + $0x32] sm:$0xff]
        %v1092 = vld [vmem:[#allocation2 + $0x3a] sm:$0xff]
        %v1093 = vld [vmem:[#allocation2 + $0x42] sm:$0xff]
        %v1094 = vmul.f32 %v1086, %v537
        %v1095 = vmul.f32 %v1087, %v538
        %v1096 = vmul.f32 %v1088, %v539
        %v1097 = vmul.f32 %v1089, %v540
        %v1098 = vmul.f32 %v1090, %v541
        %v1099 = vmul.f32 %v1091, %v542
        %v1100 = vmul.f32 %v1092, %v543
        %v1101 = vmul.f32 %v1093, %v544
        %v1102 = vld [vmem:[#allocation3] sm:$0xff]
        %v1103 = vld [vmem:[#allocation3 + $0x8] sm:$0xff]
        %v1104 = vld [vmem:[#allocation3 + $0x10] sm:$0xff]
        %v1105 = vld [vmem:[#allocation3 + $0x18] sm:$0xff]
        %v1106 = vld [vmem:[#allocation3 + $0x20] sm:$0xff]
        %v1107 = vld [vmem:[#allocation3 + $0x28] sm:$0xff]
        %v1108 = vld [vmem:[#allocation3 + $0x30] sm:$0xff]
        %v1109 = vld [vmem:[#allocation3 + $0x38] sm:$0xff]
        %s1110 = scalar_lea.vmem [#allocation4], 160
        %v1111 = vld [vmem:[%s1110] sm:$0xff]
        %v1112 = vld [vmem:[%s1110 + $0x8] sm:$0xff]
        %v1113 = vld [vmem:[%s1110 + $0x10] sm:$0xff]
        %v1114 = vld [vmem:[%s1110 + $0x18] sm:$0xff]
        %v1116 = vsel %vm371, %v1094, 0
        %v1119 = vsel %vm371, %v1095, 0
        %v1122 = vsel %vm371, %v1096, 0
        %v1125 = vsel %vm371, %v1097, 0
        %v1128 = vsel %vm371, %v1098, 0
        %v1131 = vsel %vm371, %v1099, 0
        %v1134 = vsel %vm371, %v1100, 0
        %v1137 = vsel %vm371, %v1101, 0
        %1139 = vmatpush.msra.mxu0 0.0
        %1140 = vmatpush.msra.mxu0 0.0
        %1141 = vmatpush.msra.mxu0 0.0
        %1142 = vmatpush.msra.mxu0 0.0
        %1143 = vmatpush.msra.mxu0 0.0
        %1144 = vmatpush.msra.mxu0 0.0
        %1145 = vmatpush.msra.mxu0 0.0
        %1146 = vmatpush.msra.mxu0 0.0
        %1147 = vmatpush.msra.mxu0 0.0
        %1148 = vmatpush.msra.mxu0 0.0
        %1149 = vmatpush.msra.mxu0 0.0
        %1150 = vmatpush.msra.mxu0 0.0
        %1151 = vmatpush.msra.mxu0 %v1114
        %1152 = vmatpush.msra.mxu0 %v1113
        %1153 = vmatpush.msra.mxu0 %v1112
        %1154 = vmatpush.msra.mxu0 %v1111
        %1155 = vmatmul.f32.gmra.mxu0 %v1116
        %v1156 = vpop.f32.mrf.mxu0
        %v1157 = vadd.f32 0.0, %v1156
        %1158 = vmatmul.f32.gmra.mxu0 %v1119
        %v1159 = vpop.f32.mrf.mxu0
        %v1160 = vadd.f32 0.0, %v1159
        %1161 = vmatmul.f32.gmra.mxu0 %v1122
        %v1162 = vpop.f32.mrf.mxu0
        %v1163 = vadd.f32 0.0, %v1162
        %1164 = vmatmul.f32.gmra.mxu0 %v1125
        %v1165 = vpop.f32.mrf.mxu0
        %v1166 = vadd.f32 0.0, %v1165
        %1167 = vmatmul.f32.gmra.mxu0 %v1128
        %v1168 = vpop.f32.mrf.mxu0
        %v1169 = vadd.f32 0.0, %v1168
        %1170 = vmatmul.f32.gmra.mxu0 %v1131
        %v1171 = vpop.f32.mrf.mxu0
        %v1172 = vadd.f32 0.0, %v1171
        %1173 = vmatmul.f32.gmra.mxu0 %v1134
        %v1174 = vpop.f32.mrf.mxu0
        %v1175 = vadd.f32 0.0, %v1174
        %1176 = vmatmul.f32.gmra.mxu0 %v1137
        %v1177 = vpop.f32.mrf.mxu0
        %v1178 = vadd.f32 0.0, %v1177
        %1179 = vdwg.mxu0
        %v1180 = vadd.f32 %v1102, %v1157
        %v1181 = vadd.f32 %v1103, %v1160
        %v1182 = vadd.f32 %v1104, %v1163
        %v1183 = vadd.f32 %v1105, %v1166
        %v1184 = vadd.f32 %v1106, %v1169
        %v1185 = vadd.f32 %v1107, %v1172
        %v1186 = vadd.f32 %v1108, %v1175
        %v1187 = vadd.f32 %v1109, %v1178
        %1188 = vst.msk [vmem:[#allocation3] sm:$0xff] %vm371, %v1180
        %1189 = vst.msk [vmem:[#allocation3 + $0x8] sm:$0xff] %vm371, %v1181
        %1190 = vst.msk [vmem:[#allocation3 + $0x10] sm:$0xff] %vm371, %v1182
        %1191 = vst.msk [vmem:[#allocation3 + $0x18] sm:$0xff] %vm371, %v1183
        %1192 = vst.msk [vmem:[#allocation3 + $0x20] sm:$0xff] %vm371, %v1184
        %1193 = vst.msk [vmem:[#allocation3 + $0x28] sm:$0xff] %vm371, %v1185
        %1194 = vst.msk [vmem:[#allocation3 + $0x30] sm:$0xff] %vm371, %v1186
        %1195 = vst.msk [vmem:[#allocation3 + $0x38] sm:$0xff] %vm371, %v1187
        %v1196 = vld [vmem:[#allocation2 + $0x10] sm:$0xff]
        %v1197 = vld [vmem:[#allocation2 + $0x18] sm:$0xff]
        %v1198 = vld [vmem:[#allocation2 + $0x20] sm:$0xff]
        %v1199 = vld [vmem:[#allocation2 + $0x28] sm:$0xff]
        %v1200 = vld [vmem:[#allocation2 + $0x30] sm:$0xff]
        %v1201 = vld [vmem:[#allocation2 + $0x38] sm:$0xff]
        %v1202 = vld [vmem:[#allocation2 + $0x40] sm:$0xff]
        %v1203 = vld [vmem:[#allocation2 + $0x48] sm:$0xff]
        %v1204 = vmul.f32 %v1196, %v513
        %v1205 = vmul.f32 %v1197, %v514
        %v1206 = vmul.f32 %v1198, %v515
        %v1207 = vmul.f32 %v1199, %v516
        %v1208 = vmul.f32 %v1200, %v517
        %v1209 = vmul.f32 %v1201, %v518
        %v1210 = vmul.f32 %v1202, %v519
        %v1211 = vmul.f32 %v1203, %v520
        %v1212 = vld [vmem:[#allocation3] sm:$0xff]
        %v1213 = vld [vmem:[#allocation3 + $0x8] sm:$0xff]
        %v1214 = vld [vmem:[#allocation3 + $0x10] sm:$0xff]
        %v1215 = vld [vmem:[#allocation3 + $0x18] sm:$0xff]
        %v1216 = vld [vmem:[#allocation3 + $0x20] sm:$0xff]
        %v1217 = vld [vmem:[#allocation3 + $0x28] sm:$0xff]
        %v1218 = vld [vmem:[#allocation3 + $0x30] sm:$0xff]
        %v1219 = vld [vmem:[#allocation3 + $0x38] sm:$0xff]
        %s1220 = scalar_lea.vmem [#allocation4], 192
        %v1221 = vld [vmem:[%s1220] sm:$0xff]
        %v1222 = vld [vmem:[%s1220 + $0x8] sm:$0xff]
        %v1223 = vld [vmem:[%s1220 + $0x10] sm:$0xff]
        %v1224 = vld [vmem:[%s1220 + $0x18] sm:$0xff]
        %v1226 = vsel %vm371, %v1204, 0
        %v1229 = vsel %vm371, %v1205, 0
        %v1232 = vsel %vm371, %v1206, 0
        %v1235 = vsel %vm371, %v1207, 0
        %v1238 = vsel %vm371, %v1208, 0
        %v1241 = vsel %vm371, %v1209, 0
        %v1244 = vsel %vm371, %v1210, 0
        %v1247 = vsel %vm371, %v1211, 0
        %1249 = vmatpush.msra.mxu0 0.0
        %1250 = vmatpush.msra.mxu0 0.0
        %1251 = vmatpush.msra.mxu0 0.0
        %1252 = vmatpush.msra.mxu0 0.0
        %1253 = vmatpush.msra.mxu0 0.0
        %1254 = vmatpush.msra.mxu0 0.0
        %1255 = vmatpush.msra.mxu0 0.0
        %1256 = vmatpush.msra.mxu0 0.0
        %1257 = vmatpush.msra.mxu0 0.0
        %1258 = vmatpush.msra.mxu0 0.0
        %1259 = vmatpush.msra.mxu0 0.0
        %1260 = vmatpush.msra.mxu0 0.0
        %1261 = vmatpush.msra.mxu0 %v1224
        %1262 = vmatpush.msra.mxu0 %v1223
        %1263 = vmatpush.msra.mxu0 %v1222
        %1264 = vmatpush.msra.mxu0 %v1221
        %1265 = vmatmul.f32.gmra.mxu0 %v1226
        %v1266 = vpop.f32.mrf.mxu0
        %v1267 = vadd.f32 0.0, %v1266
        %1268 = vmatmul.f32.gmra.mxu0 %v1229
        %v1269 = vpop.f32.mrf.mxu0
        %v1270 = vadd.f32 0.0, %v1269
        %1271 = vmatmul.f32.gmra.mxu0 %v1232
        %v1272 = vpop.f32.mrf.mxu0
        %v1273 = vadd.f32 0.0, %v1272
        %1274 = vmatmul.f32.gmra.mxu0 %v1235
        %v1275 = vpop.f32.mrf.mxu0
        %v1276 = vadd.f32 0.0, %v1275
        %1277 = vmatmul.f32.gmra.mxu0 %v1238
        %v1278 = vpop.f32.mrf.mxu0
        %v1279 = vadd.f32 0.0, %v1278
        %1280 = vmatmul.f32.gmra.mxu0 %v1241
        %v1281 = vpop.f32.mrf.mxu0
        %v1282 = vadd.f32 0.0, %v1281
        %1283 = vmatmul.f32.gmra.mxu0 %v1244
        %v1284 = vpop.f32.mrf.mxu0
        %v1285 = vadd.f32 0.0, %v1284
        %1286 = vmatmul.f32.gmra.mxu0 %v1247
        %v1287 = vpop.f32.mrf.mxu0
        %v1288 = vadd.f32 0.0, %v1287
        %1289 = vdwg.mxu0
        %v1290 = vadd.f32 %v1212, %v1267
        %v1291 = vadd.f32 %v1213, %v1270
        %v1292 = vadd.f32 %v1214, %v1273
        %v1293 = vadd.f32 %v1215, %v1276
        %v1294 = vadd.f32 %v1216, %v1279
        %v1295 = vadd.f32 %v1217, %v1282
        %v1296 = vadd.f32 %v1218, %v1285
        %v1297 = vadd.f32 %v1219, %v1288
        %1298 = vst.msk [vmem:[#allocation3] sm:$0xff] %vm371, %v1290
        %1299 = vst.msk [vmem:[#allocation3 + $0x8] sm:$0xff] %vm371, %v1291
        %1300 = vst.msk [vmem:[#allocation3 + $0x10] sm:$0xff] %vm371, %v1292
        %1301 = vst.msk [vmem:[#allocation3 + $0x18] sm:$0xff] %vm371, %v1293
        %1302 = vst.msk [vmem:[#allocation3 + $0x20] sm:$0xff] %vm371, %v1294
        %1303 = vst.msk [vmem:[#allocation3 + $0x28] sm:$0xff] %vm371, %v1295
        %1304 = vst.msk [vmem:[#allocation3 + $0x30] sm:$0xff] %vm371, %v1296
        %1305 = vst.msk [vmem:[#allocation3 + $0x38] sm:$0xff] %vm371, %v1297
        %v1306 = vld [vmem:[#allocation2 + $0x11] sm:$0xff]
        %v1307 = vld [vmem:[#allocation2 + $0x19] sm:$0xff]
        %v1308 = vld [vmem:[#allocation2 + $0x21] sm:$0xff]
        %v1309 = vld [vmem:[#allocation2 + $0x29] sm:$0xff]
        %v1310 = vld [vmem:[#allocation2 + $0x31] sm:$0xff]
        %v1311 = vld [vmem:[#allocation2 + $0x39] sm:$0xff]
        %v1312 = vld [vmem:[#allocation2 + $0x41] sm:$0xff]
        %v1313 = vld [vmem:[#allocation2 + $0x49] sm:$0xff]
        %v1314 = vld [vmem:[#allocation3] sm:$0xff]
        %v1315 = vld [vmem:[#allocation3 + $0x8] sm:$0xff]
        %v1316 = vld [vmem:[#allocation3 + $0x10] sm:$0xff]
        %v1317 = vld [vmem:[#allocation3 + $0x18] sm:$0xff]
        %v1318 = vld [vmem:[#allocation3 + $0x20] sm:$0xff]
        %v1319 = vld [vmem:[#allocation3 + $0x28] sm:$0xff]
        %v1320 = vld [vmem:[#allocation3 + $0x30] sm:$0xff]
        %v1321 = vld [vmem:[#allocation3 + $0x38] sm:$0xff]
        %s1322 = scalar_lea.vmem [#allocation4], 224
        %v1323 = vld [vmem:[%s1322] sm:$0xff]
        %v1324 = vld [vmem:[%s1322 + $0x8] sm:$0xff]
        %v1325 = vld [vmem:[%s1322 + $0x10] sm:$0xff]
        %v1326 = vld [vmem:[%s1322 + $0x18] sm:$0xff]
        %v1328 = vsel %vm371, %v1306, 0
        %v1331 = vsel %vm371, %v1307, 0
        %v1334 = vsel %vm371, %v1308, 0
        %v1337 = vsel %vm371, %v1309, 0
        %v1340 = vsel %vm371, %v1310, 0
        %v1343 = vsel %vm371, %v1311, 0
        %v1346 = vsel %vm371, %v1312, 0
        %v1349 = vsel %vm371, %v1313, 0
        %1351 = vmatpush.msra.mxu0 0.0
        %1352 = vmatpush.msra.mxu0 0.0
        %1353 = vmatpush.msra.mxu0 0.0
        %1354 = vmatpush.msra.mxu0 0.0
        %1355 = vmatpush.msra.mxu0 0.0
        %1356 = vmatpush.msra.mxu0 0.0
        %1357 = vmatpush.msra.mxu0 0.0
        %1358 = vmatpush.msra.mxu0 0.0
        %1359 = vmatpush.msra.mxu0 0.0
        %1360 = vmatpush.msra.mxu0 0.0
        %1361 = vmatpush.msra.mxu0 0.0
        %1362 = vmatpush.msra.mxu0 0.0
        %1363 = vmatpush.msra.mxu0 %v1326
        %1364 = vmatpush.msra.mxu0 %v1325
        %1365 = vmatpush.msra.mxu0 %v1324
        %1366 = vmatpush.msra.mxu0 %v1323
        %1367 = vmatmul.f32.gmra.mxu0 %v1328
        %v1368 = vpop.f32.mrf.mxu0
        %v1369 = vadd.f32 0.0, %v1368
        %1370 = vmatmul.f32.gmra.mxu0 %v1331
        %v1371 = vpop.f32.mrf.mxu0
        %v1372 = vadd.f32 0.0, %v1371
        %1373 = vmatmul.f32.gmra.mxu0 %v1334
        %v1374 = vpop.f32.mrf.mxu0
        %v1375 = vadd.f32 0.0, %v1374
        %1376 = vmatmul.f32.gmra.mxu0 %v1337
        %v1377 = vpop.f32.mrf.mxu0
        %v1378 = vadd.f32 0.0, %v1377
        %1379 = vmatmul.f32.gmra.mxu0 %v1340
        %v1380 = vpop.f32.mrf.mxu0
        %v1381 = vadd.f32 0.0, %v1380
        %1382 = vmatmul.f32.gmra.mxu0 %v1343
        %v1383 = vpop.f32.mrf.mxu0
        %v1384 = vadd.f32 0.0, %v1383
        %1385 = vmatmul.f32.gmra.mxu0 %v1346
        %v1386 = vpop.f32.mrf.mxu0
        %v1387 = vadd.f32 0.0, %v1386
        %1388 = vmatmul.f32.gmra.mxu0 %v1349
        %v1389 = vpop.f32.mrf.mxu0
        %v1390 = vadd.f32 0.0, %v1389
        %1391 = vdwg.mxu0
        %v1392 = vadd.f32 %v1314, %v1369
        %v1393 = vadd.f32 %v1315, %v1372
        %v1394 = vadd.f32 %v1316, %v1375
        %v1395 = vadd.f32 %v1317, %v1378
        %v1396 = vadd.f32 %v1318, %v1381
        %v1397 = vadd.f32 %v1319, %v1384
        %v1398 = vadd.f32 %v1320, %v1387
        %v1399 = vadd.f32 %v1321, %v1390
        %1400 = vst.msk [vmem:[#allocation3] sm:$0xff] %vm371, %v1392
        %1401 = vst.msk [vmem:[#allocation3 + $0x8] sm:$0xff] %vm371, %v1393
        %1402 = vst.msk [vmem:[#allocation3 + $0x10] sm:$0xff] %vm371, %v1394
        %1403 = vst.msk [vmem:[#allocation3 + $0x18] sm:$0xff] %vm371, %v1395
        %1404 = vst.msk [vmem:[#allocation3 + $0x20] sm:$0xff] %vm371, %v1396
        %1405 = vst.msk [vmem:[#allocation3 + $0x28] sm:$0xff] %vm371, %v1397
        %1406 = vst.msk [vmem:[#allocation3 + $0x30] sm:$0xff] %vm371, %v1398
        %1407 = vst.msk [vmem:[#allocation3 + $0x38] sm:$0xff] %vm371, %v1399
        %v1408 = vld [vmem:[#allocation2 + $0x12] sm:$0xff]
        %v1409 = vld [vmem:[#allocation2 + $0x1a] sm:$0xff]
        %v1410 = vld [vmem:[#allocation2 + $0x22] sm:$0xff]
        %v1411 = vld [vmem:[#allocation2 + $0x2a] sm:$0xff]
        %v1412 = vld [vmem:[#allocation2 + $0x32] sm:$0xff]
        %v1413 = vld [vmem:[#allocation2 + $0x3a] sm:$0xff]
        %v1414 = vld [vmem:[#allocation2 + $0x42] sm:$0xff]
        %v1415 = vld [vmem:[#allocation2 + $0x4a] sm:$0xff]
        %v1416 = vmul.f32 %v1408, %v537
        %v1417 = vmul.f32 %v1409, %v538
        %v1418 = vmul.f32 %v1410, %v539
        %v1419 = vmul.f32 %v1411, %v540
        %v1420 = vmul.f32 %v1412, %v541
        %v1421 = vmul.f32 %v1413, %v542
        %v1422 = vmul.f32 %v1414, %v543
        %v1423 = vmul.f32 %v1415, %v544
        %v1424 = vld [vmem:[#allocation3] sm:$0xff]
        %v1425 = vld [vmem:[#allocation3 + $0x8] sm:$0xff]
        %v1426 = vld [vmem:[#allocation3 + $0x10] sm:$0xff]
        %v1427 = vld [vmem:[#allocation3 + $0x18] sm:$0xff]
        %v1428 = vld [vmem:[#allocation3 + $0x20] sm:$0xff]
        %v1429 = vld [vmem:[#allocation3 + $0x28] sm:$0xff]
        %v1430 = vld [vmem:[#allocation3 + $0x30] sm:$0xff]
        %v1431 = vld [vmem:[#allocation3 + $0x38] sm:$0xff]
        %s1432 = scalar_lea.vmem [#allocation4], 256
        %v1433 = vld [vmem:[%s1432] sm:$0xff]
        %v1434 = vld [vmem:[%s1432 + $0x8] sm:$0xff]
        %v1435 = vld [vmem:[%s1432 + $0x10] sm:$0xff]
        %v1436 = vld [vmem:[%s1432 + $0x18] sm:$0xff]
        %v1438 = vsel %vm371, %v1416, 0
        %v1441 = vsel %vm371, %v1417, 0
        %v1444 = vsel %vm371, %v1418, 0
        %v1447 = vsel %vm371, %v1419, 0
        %v1450 = vsel %vm371, %v1420, 0
        %v1453 = vsel %vm371, %v1421, 0
        %v1456 = vsel %vm371, %v1422, 0
        %v1459 = vsel %vm371, %v1423, 0
        %1461 = vmatpush.msra.mxu0 0.0
        %1462 = vmatpush.msra.mxu0 0.0
        %1463 = vmatpush.msra.mxu0 0.0
        %1464 = vmatpush.msra.mxu0 0.0
        %1465 = vmatpush.msra.mxu0 0.0
        %1466 = vmatpush.msra.mxu0 0.0
        %1467 = vmatpush.msra.mxu0 0.0
        %1468 = vmatpush.msra.mxu0 0.0
        %1469 = vmatpush.msra.mxu0 0.0
        %1470 = vmatpush.msra.mxu0 0.0
        %1471 = vmatpush.msra.mxu0 0.0
        %1472 = vmatpush.msra.mxu0 0.0
        %1473 = vmatpush.msra.mxu0 %v1436
        %1474 = vmatpush.msra.mxu0 %v1435
        %1475 = vmatpush.msra.mxu0 %v1434
        %1476 = vmatpush.msra.mxu0 %v1433
        %1477 = vmatmul.f32.gmra.mxu0 %v1438
        %v1478 = vpop.f32.mrf.mxu0
        %v1479 = vadd.f32 0.0, %v1478
        %1480 = vmatmul.f32.gmra.mxu0 %v1441
        %v1481 = vpop.f32.mrf.mxu0
        %v1482 = vadd.f32 0.0, %v1481
        %1483 = vmatmul.f32.gmra.mxu0 %v1444
        %v1484 = vpop.f32.mrf.mxu0
        %v1485 = vadd.f32 0.0, %v1484
        %1486 = vmatmul.f32.gmra.mxu0 %v1447
        %v1487 = vpop.f32.mrf.mxu0
        %v1488 = vadd.f32 0.0, %v1487
        %1489 = vmatmul.f32.gmra.mxu0 %v1450
        %v1490 = vpop.f32.mrf.mxu0
        %v1491 = vadd.f32 0.0, %v1490
        %1492 = vmatmul.f32.gmra.mxu0 %v1453
        %v1493 = vpop.f32.mrf.mxu0
        %v1494 = vadd.f32 0.0, %v1493
        %1495 = vmatmul.f32.gmra.mxu0 %v1456
        %v1496 = vpop.f32.mrf.mxu0
        %v1497 = vadd.f32 0.0, %v1496
        %1498 = vmatmul.f32.gmra.mxu0 %v1459
        %v1499 = vpop.f32.mrf.mxu0
        %v1500 = vadd.f32 0.0, %v1499
        %1501 = vdwg.mxu0
        %v1502 = vadd.f32 %v1424, %v1479
        %v1503 = vadd.f32 %v1425, %v1482
        %v1504 = vadd.f32 %v1426, %v1485
        %v1505 = vadd.f32 %v1427, %v1488
        %v1506 = vadd.f32 %v1428, %v1491
        %v1507 = vadd.f32 %v1429, %v1494
        %v1508 = vadd.f32 %v1430, %v1497
        %v1509 = vadd.f32 %v1431, %v1500
        %1510 = vst.msk [vmem:[#allocation3] sm:$0xff] %vm371, %v1502
        %1511 = vst.msk [vmem:[#allocation3 + $0x8] sm:$0xff] %vm371, %v1503
        %1512 = vst.msk [vmem:[#allocation3 + $0x10] sm:$0xff] %vm371, %v1504
        %1513 = vst.msk [vmem:[#allocation3 + $0x18] sm:$0xff] %vm371, %v1505
        %1514 = vst.msk [vmem:[#allocation3 + $0x20] sm:$0xff] %vm371, %v1506
        %1515 = vst.msk [vmem:[#allocation3 + $0x28] sm:$0xff] %vm371, %v1507
        %1516 = vst.msk [vmem:[#allocation3 + $0x30] sm:$0xff] %vm371, %v1508
        %1517 = vst.msk [vmem:[#allocation3 + $0x38] sm:$0xff] %vm371, %v1509
        %v1518 = vld [vmem:[#allocation3] sm:$0xff]
        %v1519 = vld [vmem:[#allocation3 + $0x8] sm:$0xff]
        %v1520 = vld [vmem:[#allocation3 + $0x10] sm:$0xff]
        %v1521 = vld [vmem:[#allocation3 + $0x18] sm:$0xff]
        %v1522 = vld [vmem:[#allocation3 + $0x20] sm:$0xff]
        %v1523 = vld [vmem:[#allocation3 + $0x28] sm:$0xff]
        %v1524 = vld [vmem:[#allocation3 + $0x30] sm:$0xff]
        %v1525 = vld [vmem:[#allocation3 + $0x38] sm:$0xff]
        %v1526 = vld [vmem:[%s4] sm:$0x1]
        %v1528 = vperm.slane %v1526, 0
        %v1530 = vadd.f32 %v1518, %v1528
        %v1531 = vadd.f32 %v1519, %v1528
        %v1532 = vadd.f32 %v1520, %v1528
        %v1533 = vadd.f32 %v1521, %v1528
        %v1534 = vadd.f32 %v1522, %v1528
        %v1535 = vadd.f32 %v1523, %v1528
        %v1536 = vadd.f32 %v1524, %v1528
        %v1537 = vadd.f32 %v1525, %v1528
        %v1538 = vmax.f32 %v1530, 0.0
        %v1539 = vmax.f32 %v1531, 0.0
        %v1540 = vmax.f32 %v1532, 0.0
        %v1541 = vmax.f32 %v1533, 0.0
        %v1542 = vmax.f32 %v1534, 0.0
        %v1543 = vmax.f32 %v1535, 0.0
        %v1544 = vmax.f32 %v1536, 0.0
        %v1545 = vmax.f32 %v1537, 0.0
        %v1546 = vld [vmem:[%s5] sm:$0xff]
        %v1547 = vld [vmem:[%s5 + $0x8] sm:$0xff]
        %v1548 = vld [vmem:[%s5 + $0x10] sm:$0xff]
        %v1549 = vld [vmem:[%s5 + $0x18] sm:$0xff]
        %v1550 = vld [vmem:[%s6] sm:$0x1]
        %v1552 = vperm.slane %v1550, 0
        %v1555 = vsel %vm371, %v1538, 0
        %v1558 = vsel %vm371, %v1539, 0
        %v1561 = vsel %vm371, %v1540, 0
        %v1564 = vsel %vm371, %v1541, 0
        %v1567 = vsel %vm371, %v1542, 0
        %v1570 = vsel %vm371, %v1543, 0
        %v1573 = vsel %vm371, %v1544, 0
        %v1576 = vsel %vm371, %v1545, 0
        %1578 = vmatpush.msra.mxu0 0.0
        %1579 = vmatpush.msra.mxu0 0.0
        %1580 = vmatpush.msra.mxu0 0.0
        %1581 = vmatpush.msra.mxu0 0.0
        %1582 = vmatpush.msra.mxu0 0.0
        %1583 = vmatpush.msra.mxu0 0.0
        %1584 = vmatpush.msra.mxu0 0.0
        %1585 = vmatpush.msra.mxu0 0.0
        %1586 = vmatpush.msra.mxu0 0.0
        %1587 = vmatpush.msra.mxu0 0.0
        %1588 = vmatpush.msra.mxu0 0.0
        %1589 = vmatpush.msra.mxu0 0.0
        %1590 = vmatpush.msra.mxu0 %v1549
        %1591 = vmatpush.msra.mxu0 %v1548
        %1592 = vmatpush.msra.mxu0 %v1547
        %1593 = vmatpush.msra.mxu0 %v1546
        %1594 = vmatmul.f32.gmra.mxu0 %v1555
        %v1595 = vpop.f32.mrf.mxu0
        %v1596 = vadd.f32 %v1552, %v1595
        %1597 = vmatmul.f32.gmra.mxu0 %v1558
        %v1598 = vpop.f32.mrf.mxu0
        %v1599 = vadd.f32 %v1552, %v1598
        %1600 = vmatmul.f32.gmra.mxu0 %v1561
        %v1601 = vpop.f32.mrf.mxu0
        %v1602 = vadd.f32 %v1552, %v1601
        %1603 = vmatmul.f32.gmra.mxu0 %v1564
        %v1604 = vpop.f32.mrf.mxu0
        %v1605 = vadd.f32 %v1552, %v1604
        %1606 = vmatmul.f32.gmra.mxu0 %v1567
        %v1607 = vpop.f32.mrf.mxu0
        %v1608 = vadd.f32 %v1552, %v1607
        %1609 = vmatmul.f32.gmra.mxu0 %v1570
        %v1610 = vpop.f32.mrf.mxu0
        %v1611 = vadd.f32 %v1552, %v1610
        %1612 = vmatmul.f32.gmra.mxu0 %v1573
        %v1613 = vpop.f32.mrf.mxu0
        %v1614 = vadd.f32 %v1552, %v1613
        %1615 = vmatmul.f32.gmra.mxu0 %v1576
        %v1616 = vpop.f32.mrf.mxu0
        %v1617 = vadd.f32 %v1552, %v1616
        %1618 = vdwg.mxu0
        %v1619 = vld [vmem:[%s293] sm:$0xff]
        %v1620 = vld [vmem:[%s293 + $0x8] sm:$0xff]
        %v1621 = vld [vmem:[%s293 + $0x10] sm:$0xff]
        %v1622 = vld [vmem:[%s293 + $0x18] sm:$0xff]
        %v1623 = vld [vmem:[%s293 + $0x20] sm:$0xff]
        %v1624 = vld [vmem:[%s293 + $0x28] sm:$0xff]
        %v1625 = vld [vmem:[%s293 + $0x30] sm:$0xff]
        %v1626 = vld [vmem:[%s293 + $0x38] sm:$0xff]
        %v1627 = vadd.f32 %v1596, %v1619
        %v1628 = vadd.f32 %v1599, %v1620
        %v1629 = vadd.f32 %v1602, %v1621
        %v1630 = vadd.f32 %v1605, %v1622
        %v1631 = vadd.f32 %v1608, %v1623
        %v1632 = vadd.f32 %v1611, %v1624
        %v1633 = vadd.f32 %v1614, %v1625
        %v1634 = vadd.f32 %v1617, %v1626
        %v1635 = vmax.f32 %v1627, 0.0
        %v1636 = vmax.f32 %v1628, 0.0
        %v1637 = vmax.f32 %v1629, 0.0
        %v1638 = vmax.f32 %v1630, 0.0
        %v1639 = vmax.f32 %v1631, 0.0
        %v1640 = vmax.f32 %v1632, 0.0
        %v1641 = vmax.f32 %v1633, 0.0
        %v1642 = vmax.f32 %v1634, 0.0
        %1643 = vst [vmem:[%s288] sm:$0xff] %v1635
        %1644 = vst [vmem:[%s288 + $0x8] sm:$0xff] %v1636
        %1645 = vst [vmem:[%s288 + $0x10] sm:$0xff] %v1637
        %1646 = vst [vmem:[%s288 + $0x18] sm:$0xff] %v1638
        %1647 = vst [vmem:[%s288 + $0x20] sm:$0xff] %v1639
        %1648 = vst [vmem:[%s288 + $0x28] sm:$0xff] %v1640
        %1649 = vst [vmem:[%s288 + $0x30] sm:$0xff] %v1641
        %1650 = vst [vmem:[%s288 + $0x38] sm:$0xff] %v1642
        %s1651 = sand.u32 %s182, 1
        %s1652 = scalar_lea.sflag [#allocation6], %s1651
        %s1653 = sand.u32 %s182, 1
        %s1654 = smul.addr %s1653, 64
        %s1655 = scalar_lea.vmem [#allocation7], %s1654
        // Predicated region
        $region53: #{tpu_custom_call.1} parent=47 // pred_check
          %p1656 = pneg %p192
        $region54: #{tpu_custom_call.1} parent=47 // pred_check_branch
          %1658 = sbr.rel (%p1656) target = $region56
        $region55: #{tpu_custom_call.1} parent=47 // pred_region
          %1660 = vsyncadd %s1652, 0
          %s1661 = smul.addr %s22, 8
          %s1662 = smul.addr %s1661, 8
          %s1663 = scalar_lea.hbm %s7, %s1662
          %s1664 = sshll.u32 %s1655, 4
          %s1665 = int_to_ptr.vmem [resolvable:$true] %s1664
          %s1666 = sshll.u32 %s1663, 4
          %s1667 = int_to_ptr.hbm [resolvable:$true] %s1666
          %1672 = dma.vmem_to_hbm [thread:$0]  %s1665, 1024, %s1667, %s1652, 128, 128, 8
        $region56: #{tpu_custom_call.1} parent=47 // pred_fallthru
          _
      $region48: #{tpu_custom_call.1} parent=5 // pred_fallthru
        _
      %p1673 = scmp.le.s32.totalorder 2, %s17
      // Predicated region
      $region57: #{tpu_custom_call.1} parent=5 // pred_check
        %p1674 = pneg %p1673
      $region58: #{tpu_custom_call.1} parent=5 // pred_check_branch
        %1676 = sbr.rel (%p1674) target = $region60
      $region59: #{tpu_custom_call.1} parent=5 // pred_region
        %s1677 = ssub.s32 %s17, 2
        // Predicated region
        $region61: #{tpu_custom_call.1} parent=59 // pred_check
          %p1678 = pneg %p198
        $region62: #{tpu_custom_call.1} parent=59 // pred_check_branch
          %1680 = sbr.rel (%p1678) target = $region64
        $region63: #{tpu_custom_call.1} parent=59 // pred_region
          %s1681 = sand.u32 %s183, 1
          %s1682 = scalar_lea.sflag [#allocation6], %s1681
          %s1683 = sand.u32 %s183, 1
          %s1684 = smul.addr %s1683, 64
          %s1685 = scalar_lea.vmem [#allocation7], %s1684
          %1687 = dma.done %s1682, 1024
        $region64: #{tpu_custom_call.1} parent=59 // pred_fallthru
          _
      $region60: #{tpu_custom_call.1} parent=5 // pred_fallthru
        _
    $region6: #{tpu_custom_call.1} parent=1 // loop_footer
      %s21 = sadd.s32 1, %s17
    $region7: #{tpu_custom_call.1} parent=1 // loop_footer_branch
      %16 = sbr.rel target = $region3
    $region8: #{tpu_custom_call.1} parent=1 // loop_exit
      _
    %1688 = vsyncpa [#allocation5], 1
    %s1689 = scalar_lea.sflag [#allocation5], 1
    %1690 = vsyncpa %s1689, 1
    %1691 = vsyncpa [#allocation6], 1
    %s1692 = scalar_lea.sflag [#allocation6], 1
    %1693 = vsyncpa %s1692, 1

</llo_original>
